<compile_context>
chip_gen: v6e
topology: v6e:2x2x1
jax: 0.10.0
libtpu: 0.0.40
codegen_flags: <defaults>
</compile_context>

<pallas_src>
import functools
import math

import jax
import jax.numpy as jnp
from jax.experimental import pallas as pl
from jax.experimental.pallas import tpu as pltpu


# ----------------------------- per-generation sizing -----------------------------

def _tpu_vmem_capacity_bytes():
    try:
        info = pltpu.get_tpu_info()
        cap = getattr(info, "vmem_capacity_bytes", None)
        if cap:
            return int(cap)
    except Exception:
        pass
    return 64 * 1024 * 1024  # conservative default (v7x per-core VMEM)


_VMEM_CAP = _tpu_vmem_capacity_bytes()
# ~96 MiB on the 128-MiB parts (v5e/v6e), 48 MiB on v7x's 64-MiB VMEM.
_VMEM_LIMIT = min((_VMEM_CAP * 3) // 4, 100 * 1024 * 1024)
# Bigger row tiles where VMEM allows it.
_TM_MAX = 512 if _VMEM_CAP >= 100 * 1024 * 1024 else 256


def _round_up(x, m):
    return (x + m - 1) // m * m


# ----------------------------- fused linear kernel -----------------------------

def _fused_linear_kernel(*refs, has_bias, has_ln, has_residual, activation,
                         transpose_w, eps):
    it = iter(refs)
    x_ref = next(it)
    w_ref = next(it)
    b_ref = next(it) if has_bias else None
    if has_ln:
        g_ref = next(it)
        bt_ref = next(it)
    r_ref = next(it) if has_residual else None
    o_ref = next(it)

    # Optional LayerNorm fused in front of the matmul (f32 math).
    if has_ln:
        x = x_ref[...].astype(jnp.float32)
        mean = jnp.mean(x, axis=-1, keepdims=True)
        var = jnp.mean(jnp.square(x - mean), axis=-1, keepdims=True)
        x = (x - mean) * jax.lax.rsqrt(var + eps)
        x = x * g_ref[...].astype(jnp.float32) + bt_ref[...].astype(jnp.float32)
        xb = x.astype(jnp.bfloat16)
    else:
        xb = x_ref[...].astype(jnp.bfloat16)

    # MXU matmul with bf16 operands, f32 accumulation.
    wb = w_ref[...].astype(jnp.bfloat16)
    if transpose_w:
        # y = x @ W^T  (weight stored [N, K], e.g. the tied token embedding).
        y = jax.lax.dot_general(xb, wb, (((1,), (1,)), ((), ())),
                                preferred_element_type=jnp.float32)
    else:
        y = jnp.dot(xb, wb, preferred_element_type=jnp.float32)

    if has_bias:
        y = y + b_ref[...].astype(jnp.float32)
    if activation == "gelu":
        # TODO(synk): nn.GELU default is exact erf; tanh-approx used for
        # guaranteed Mosaic lowering (difference ~1e-3).
        y = jax.nn.gelu(y, approximate=True)
    if has_residual:
        y = y + r_ref[...].astype(jnp.float32)
    o_ref[...] = y.astype(o_ref.dtype)


def fused_linear(x, w, b=None, *, ln=None, activation=None, residual=None,
                 transpose_w=False, out_dtype=None):
    """y = act(LN(x) @ W + b) + residual, fused in one Pallas kernel.

    x: [M, K]; w: [K, N] (or [N, K] if transpose_w); b: [N] or None;
    ln: (gamma, beta, eps) or None; residual: [M, N] or None.
    """
    M, K = x.shape
    N = w.shape[0] if transpose_w else w.shape[1]
    out_dtype = x.dtype if out_dtype is None else out_dtype

    # ---- N tiling: lane-dense (128-aligned) tiles, or a full-dim block for
    # small misaligned N.  Large misaligned N (e.g. vocab 50257) is padded so a
    # single output block never exceeds VMEM (critical on v7x).
    if N % 128 == 0:
        n_pad = N
        tn = 512 if N % 512 == 0 else (256 if N % 256 == 0 else 128)
    elif N <= 512:
        n_pad, tn = N, N                      # full-dim block: legal for any N
    else:
        n_pad = _round_up(N, 128)
        tn = 512 if n_pad % 512 == 0 else (256 if n_pad % 256 == 0 else 128)

    if n_pad != N:
        pad_n = n_pad - N
        w = jnp.pad(w, ((0, pad_n), (0, 0)) if transpose_w else ((0, 0), (0, pad_n)))
        if b is not None:
            b = jnp.pad(b, (0, pad_n))
        if residual is not None:
            residual = jnp.pad(residual, ((0, 0), (0, pad_n)))

    # ---- M tiling: no input padding; Pallas masks the ragged last block.
    if M <= _TM_MAX:
        tm = M                                # full-dim block: legal for any M
        m_blocks = 1
    else:
        tm = _TM_MAX
        m_blocks = pl.cdiv(M, tm)
    n_blocks = n_pad // tn

    # TODO(synk): K (= n_embd) stays untiled so LayerNorm can be fused; for very
    # large hidden sizes add a K-tiled f32-accumulator path ("arbitrary" axis).

    args = [x]
    # Weight-stationary grid: N (j) is the slow outer axis, M (i) the fast inner
    # one, so each weight tile is fetched from HBM exactly once.
    in_specs = [pl.BlockSpec((tm, K), lambda j, i: (i, 0))]

    args.append(w)
    if transpose_w:
        in_specs.append(pl.BlockSpec((tn, K), lambda j, i: (j, 0)))
    else:
        in_specs.append(pl.BlockSpec((K, tn), lambda j, i: (0, j)))

    if b is not None:
        args.append(b.reshape(1, n_pad))
        in_specs.append(pl.BlockSpec((1, tn), lambda j, i: (0, j)))

    if ln is not None:
        gamma, beta, eps = ln
        args.append(gamma.reshape(1, K))
        in_specs.append(pl.BlockSpec((1, K), lambda j, i: (0, 0)))
        args.append(beta.reshape(1, K))
        in_specs.append(pl.BlockSpec((1, K), lambda j, i: (0, 0)))
    else:
        eps = 0.0

    if residual is not None:
        args.append(residual)
        in_specs.append(pl.BlockSpec((tm, tn), lambda j, i: (i, j)))

    kernel = functools.partial(
        _fused_linear_kernel,
        has_bias=b is not None, has_ln=ln is not None,
        has_residual=residual is not None,
        activation=activation, transpose_w=transpose_w, eps=eps)

    out = pl.pallas_call(
        kernel,
        out_shape=jax.ShapeDtypeStruct((M, n_pad), out_dtype),
        grid=(n_blocks, m_blocks),
        in_specs=in_specs,
        out_specs=pl.BlockSpec((tm, tn), lambda j, i: (i, j)),
        compiler_params=pltpu.CompilerParams(
            dimension_semantics=("parallel", "parallel"),
            vmem_limit_bytes=_VMEM_LIMIT),
    )(*args)
    return out[:, :N] if n_pad != N else out


# ----------------------------- attention kernel -----------------------------

def _attention_kernel(q_ref, k_ref, v_ref, o_ref, *, n_head, scale):
    # One batch element per grid step; q/k/v tiles are [1, H, S, dh] bf16.
    q = q_ref[0]                               # [H, S, dh]
    k = k_ref[0]
    v = v_ref[0]
    S = q.shape[1]

    # Head-batched score matmul on the MXU (no static per-head unroll).
    s = jnp.einsum('hqd,hkd->hqk', q, k,
                   preferred_element_type=jnp.float32)          # [H, S, S]

    # Causal mask built once, shared across heads.
    row = jax.lax.broadcasted_iota(jnp.int32, (S, S), 0)
    col = jax.lax.broadcasted_iota(jnp.int32, (S, S), 1)
    causal = (col <= row)[None, :, :]
    # Reference order: mask (w*b + -1e5*(1-b)) then divide by sqrt(d_head).
    s = jnp.where(causal, s, jnp.float32(-100000.0)) * scale

    # Numerically-stable softmax (matches AttentionLayer._softmax), f32 math.
    m = jnp.max(s, axis=-1, keepdims=True)
    e = jnp.exp(s - m)
    p = e * pl.reciprocal(jnp.sum(e, axis=-1, keepdims=True), approx=True)

    out = jnp.einsum('hqk,hkd->hqd', p.astype(jnp.bfloat16), v,
                     preferred_element_type=jnp.float32)        # [H, S, dh]

    # Merge heads in-VMEM and issue a single lane-dense [S, D] store.
    merged = jnp.concatenate([out[h] for h in range(n_head)], axis=-1)
    o_ref[0] = merged.astype(o_ref.dtype)

    # TODO(synk): for long sequences, tile the kv axis flash-style; S is tiny
    # here so the full [H, S, S] score block sits comfortably in VMEM.
    # TODO(synk): for B=1 decode on v7x, split the grid over (B, q_block) or
    # heads so both TensorCores have work.


def causal_attention(qkv, *, n_head, d_head, out_dtype=jnp.bfloat16):
    """qkv: [B, S, 3D] fused projection (bf16) -> [B, S, D] merged-head output."""
    B, S, _ = qkv.shape
    D = n_head * d_head
    # Head-major layout prepared once in the wrapper (cheap XLA reshape/transpose
    # of the bf16 qkv) so the kernel never column-slices 64-lane chunks out of a
    # [S, 3D] vreg block.
    qkv_h = qkv.reshape(B, S, 3, n_head, d_head)
    q = jnp.transpose(qkv_h[:, :, 0], (0, 2, 1, 3))             # [B, H, S, dh]
    k = jnp.transpose(qkv_h[:, :, 1], (0, 2, 1, 3))
    v = jnp.transpose(qkv_h[:, :, 2], (0, 2, 1, 3))

    kernel = functools.partial(_attention_kernel, n_head=n_head,
                               scale=1.0 / math.sqrt(d_head))
    qkv_spec = pl.BlockSpec((1, n_head, S, d_head), lambda b: (b, 0, 0, 0))
    return pl.pallas_call(
        kernel,
        out_shape=jax.ShapeDtypeStruct((B, S, D), out_dtype),
        grid=(B,),
        in_specs=[qkv_spec, qkv_spec, qkv_spec],
        out_specs=pl.BlockSpec((1, S, D), lambda b: (b, 0, 0)),
        compiler_params=pltpu.CompilerParams(
            dimension_semantics=("parallel",),
            vmem_limit_bytes=_VMEM_LIMIT),
    )(q, k, v)


# ----------------------------- Model (glue) -----------------------------

class Config:
    def __init__(self):
        self.vocab_size = 64
        self.n_positions = 16
        self.n_ctx = 16
        self.n_embd = 32
        self.hidden_size = 32
        self.n_head = 4
        self.n_layer = 2
        self.layer_norm_epsilon = 1e-5


def init_params(key, cfg):
    D, V = cfg.n_embd, cfg.vocab_size
    keys = jax.random.split(key, 2 + 4 * cfg.n_layer)
    token_embd = jax.random.normal(keys[0], (V, D), jnp.float32)  # nn.Embedding: N(0,1)
    params = {
        "token_embd": token_embd,
        # Tied bf16 copy for the LM-head matmul: halves the largest HBM read.
        "token_embd_bf16": token_embd.astype(jnp.bfloat16),
        "pos_embd": jax.random.normal(keys[1], (cfg.n_positions, D), jnp.float32),
        "layers": [],
    }
    for l in range(cfg.n_layer):
        k0, k1, k2, k3 = keys[2 + 4 * l: 6 + 4 * l]
        layer = {
            "ln1_g": jnp.ones((D,), jnp.float32),
            "ln1_b": jnp.zeros((D,), jnp.float32),
            # Conv1D: weight [in, out], std=0.02; bias zeros.  Weights stored in
            # bf16 (MXU operand dtype) to halve weight HBM traffic.
            "c_attn_w": (0.02 * jax.random.normal(k0, (D, 3 * D), jnp.float32)).astype(jnp.bfloat16),
            "c_attn_b": jnp.zeros((3 * D,), jnp.float32),
            "c_proj_w": (0.02 * jax.random.normal(k1, (D, D), jnp.float32)).astype(jnp.bfloat16),
            "c_proj_b": jnp.zeros((D,), jnp.float32),
            "ln2_g": jnp.ones((D,), jnp.float32),
            "ln2_b": jnp.zeros((D,), jnp.float32),
            "mlp_fc_w": (0.02 * jax.random.normal(k2, (D, 4 * D), jnp.float32)).astype(jnp.bfloat16),
            "mlp_fc_b": jnp.zeros((4 * D,), jnp.float32),
            "mlp_proj_w": (0.02 * jax.random.normal(k3, (4 * D, D), jnp.float32)).astype(jnp.bfloat16),
            "mlp_proj_b": jnp.zeros((D,), jnp.float32),
        }
        params["layers"].append(layer)
    return params


def gpt_lm_head_forward(params, input_ids, cfg):
    B, S = input_ids.shape
    D, H = cfg.n_embd, cfg.n_head
    dh = D // H
    eps = cfg.layer_norm_epsilon
    assert S <= cfg.n_positions, "sequence length exceeds n_positions"

    # Embedding lookups (glue gather) + position embeddings (arange positions).
    tok = jnp.take(params["token_embd"], input_ids, axis=0)      # [B, S, D]
    pos = params["pos_embd"][:S]                                 # [S, D]
    x = (tok + pos[None, :, :]).astype(jnp.float32).reshape(B * S, D)
    # TODO(synk): embd/attn/resid dropouts are identity (eval mode).

    for lp in params["layers"]:
        # --- attention block: LN1 fused into qkv projection (bf16 activation) ---
        qkv = fused_linear(x, lp["c_attn_w"], lp["c_attn_b"],
                           ln=(lp["ln1_g"], lp["ln1_b"], eps),
                           out_dtype=jnp.bfloat16)               # [B*S, 3D] bf16
        attn = causal_attention(qkv.reshape(B, S, 3 * D),
                                n_head=H, d_head=dh)             # [B, S, D] bf16
        # c_proj with residual add fused; residual stream stays f32.
        x = fused_linear(attn.reshape(B * S, D), lp["c_proj_w"], lp["c_proj_b"],
                         residual=x, out_dtype=jnp.float32)      # [B*S, D]

        # --- MLP block: LN2 + GELU fused into fc (bf16); residual fused into proj ---
        ffh = fused_linear(x, lp["mlp_fc_w"], lp["mlp_fc_b"],
                           ln=(lp["ln2_g"], lp["ln2_b"], eps), activation="gelu",
                           out_dtype=jnp.bfloat16)               # [B*S, 4D] bf16
        x = fused_linear(ffh, lp["mlp_proj_w"], lp["mlp_proj_b"],
                         residual=x, out_dtype=jnp.float32)

    hidden = x.reshape(B, S, D)
    # LM head (tied with token embedding): logits = h @ E^T, no bias, no HBM
    # transpose — the bf16 [V, D] embedding is contracted on its last dim in-kernel.
    logits = fused_linear(x, params["token_embd_bf16"], None, transpose_w=True,
                          out_dtype=jnp.float32)
    return logits.reshape(B, S, cfg.vocab_size), hidden


if __name__ == "__main__":
    cfg = Config()
    key = jax.random.PRNGKey(0)
    pkey, ikey = jax.random.split(key)
    params = init_params(pkey, cfg)

    B, S = 2, 8
    input_ids = jax.random.randint(ikey, (B, S), 0, cfg.vocab_size, dtype=jnp.int32)

    forward = jax.jit(lambda p, ids: gpt_lm_head_forward(p, ids, cfg))
    logits, hidden = forward(params, input_ids)
    jax.block_until_ready(logits)
    jax.block_until_ready(hidden)

    assert logits.shape == (B, S, cfg.vocab_size)
    assert hidden.shape == (B, S, cfg.n_embd)
    assert bool(jnp.all(jnp.isfinite(logits)))
    print("KERNEL_OK")
</pallas_src>

<mosaic_0001>
module attributes {stable_mosaic.version = 11 : i64} {
  func.func @_fused_linear_kernel(%arg0: i32, %arg1: i32, %arg2: memref<16x32xf32, #tpu.memory_space<vmem>>, %arg3: memref<32x96xbf16, #tpu.memory_space<vmem>>, %arg4: memref<1x96xf32, #tpu.memory_space<vmem>>, %arg5: memref<1x32xf32, #tpu.memory_space<vmem>>, %arg6: memref<1x32xf32, #tpu.memory_space<vmem>>, %arg7: memref<16x96xbf16, #tpu.memory_space<vmem>>) attributes {dimension_semantics = [#tpu.dimension_semantics<parallel>, #tpu.dimension_semantics<parallel>], iteration_bounds = array<i64: 1, 1>, scalar_prefetch = 0 : i64, scratch_operands = 0 : i64, tpu.core_type = #tpu.core_type<tc>, window_params = [{transform_indices = @transform_0, window_bounds = array<i64: 16, 32>}, {transform_indices = @transform_1, window_bounds = array<i64: 32, 96>}, {transform_indices = @transform_2, window_bounds = array<i64: 1, 96>}, {pipeline_mode = #tpu.pipeline_mode<synchronous>, transform_indices = @transform_3, window_bounds = array<i64: 1, 32>}, {pipeline_mode = #tpu.pipeline_mode<synchronous>, transform_indices = @transform_4, window_bounds = array<i64: 1, 32>}, {transform_indices = @transform_5, window_bounds = array<i64: 16, 96>}]} {
    %c0 = arith.constant 0 : index
    %c0_0 = arith.constant 0 : index
    %0 = vector.load %arg2[%c0, %c0_0] : memref<16x32xf32, #tpu.memory_space<vmem>>, vector<16x32xf32>
    %cst = arith.constant dense<0.000000e+00> : vector<16xf32>
    %1 = vector.multi_reduction <add>, %0, %cst [1] : vector<16x32xf32> to vector<16xf32>
    %2 = vector.shape_cast %1 : vector<16xf32> to vector<16x1xf32>
    %cst_1 = arith.constant 3.200000e+01 : f32
    %3 = vector.broadcast %cst_1 : f32 to vector<16x1xf32>
    %4 = arith.divf %2, %3 : vector<16x1xf32>
    %5 = vector.broadcast %4 : vector<16x1xf32> to vector<16x32xf32>
    %6 = arith.subf %0, %5 : vector<16x32xf32>
    %7 = arith.mulf %6, %6 : vector<16x32xf32>
    %cst_2 = arith.constant dense<0.000000e+00> : vector<16xf32>
    %8 = vector.multi_reduction <add>, %7, %cst_2 [1] : vector<16x32xf32> to vector<16xf32>
    %9 = vector.shape_cast %8 : vector<16xf32> to vector<16x1xf32>
    %cst_3 = arith.constant 3.200000e+01 : f32
    %10 = vector.broadcast %cst_3 : f32 to vector<16x1xf32>
    %11 = arith.divf %9, %10 : vector<16x1xf32>
    %12 = vector.broadcast %4 : vector<16x1xf32> to vector<16x32xf32>
    %13 = arith.subf %0, %12 : vector<16x32xf32>
    %cst_4 = arith.constant 9.99999974E-6 : f32
    %14 = vector.broadcast %cst_4 : f32 to vector<16x1xf32>
    %15 = arith.addf %11, %14 : vector<16x1xf32>
    %16 = math.rsqrt %15 : vector<16x1xf32>
    %17 = vector.broadcast %16 : vector<16x1xf32> to vector<16x32xf32>
    %18 = arith.mulf %13, %17 : vector<16x32xf32>
    %c0_5 = arith.constant 0 : index
    %c0_6 = arith.constant 0 : index
    %19 = vector.load %arg5[%c0_5, %c0_6] : memref<1x32xf32, #tpu.memory_space<vmem>>, vector<1x32xf32>
    %20 = vector.broadcast %19 : vector<1x32xf32> to vector<16x32xf32>
    %21 = arith.mulf %18, %20 : vector<16x32xf32>
    %c0_7 = arith.constant 0 : index
    %c0_8 = arith.constant 0 : index
    %22 = vector.load %arg6[%c0_7, %c0_8] : memref<1x32xf32, #tpu.memory_space<vmem>>, vector<1x32xf32>
    %23 = vector.broadcast %22 : vector<1x32xf32> to vector<16x32xf32>
    %24 = arith.addf %21, %23 : vector<16x32xf32>
    %25 = arith.truncf %24 : vector<16x32xf32> to vector<16x32xbf16>
    %c0_9 = arith.constant 0 : index
    %c0_10 = arith.constant 0 : index
    %26 = vector.load %arg3[%c0_9, %c0_10] : memref<32x96xbf16, #tpu.memory_space<vmem>>, vector<32x96xbf16>
    %cst_11 = arith.constant dense<0.000000e+00> : vector<16x96xf32>
    %27 = tpu.matmul %25, %26, %cst_11 {dimension_numbers = #tpu.dot_dimension_numbers<[1], [0], [0], [1], [0, 0, 1, 1], [], []>} : vector<16x32xbf16>, vector<32x96xbf16>, vector<16x96xf32> -> vector<16x96xf32>
    %c0_12 = arith.constant 0 : index
    %c0_13 = arith.constant 0 : index
    %28 = vector.load %arg4[%c0_12, %c0_13] : memref<1x96xf32, #tpu.memory_space<vmem>>, vector<1x96xf32>
    %29 = vector.broadcast %28 : vector<1x96xf32> to vector<16x96xf32>
    %30 = arith.addf %27, %29 : vector<16x96xf32>
    %31 = arith.truncf %30 : vector<16x96xf32> to vector<16x96xbf16>
    %c0_14 = arith.constant 0 : index
    %c0_15 = arith.constant 0 : index
    %32 = vector.load %arg7[%c0_14, %c0_15] : memref<16x96xbf16, #tpu.memory_space<vmem>>, vector<16x96xbf16>
    tpu.vector_store %arg7[%c0_14, %c0_15], %31 {strides = array<i32>} : memref<16x96xbf16, #tpu.memory_space<vmem>>, vector<16x96xbf16>,
    return
  }
  func.func @transform_0(%arg0: i32, %arg1: i32) -> (i32, i32) {
    %c0_i32 = arith.constant 0 : i32
    %c0_i32_0 = arith.constant 0 : i32
    return %arg1, %c0_i32 : i32, i32
  }
  func.func @transform_1(%arg0: i32, %arg1: i32) -> (i32, i32) {
    %c0_i32 = arith.constant 0 : i32
    %c0_i32_0 = arith.constant 0 : i32
    return %c0_i32, %arg0 : i32, i32
  }
  func.func @transform_2(%arg0: i32, %arg1: i32) -> (i32, i32) {
    %c0_i32 = arith.constant 0 : i32
    %c0_i32_0 = arith.constant 0 : i32
    return %c0_i32, %arg0 : i32, i32
  }
  func.func @transform_3(%arg0: i32, %arg1: i32) -> (i32, i32) {
    %c0_i32 = arith.constant 0 : i32
    %c0_i32_0 = arith.constant 0 : i32
    %c0_i32_1 = arith.constant 0 : i32
    return %c0_i32, %c0_i32_0 : i32, i32
  }
  func.func @transform_4(%arg0: i32, %arg1: i32) -> (i32, i32) {
    %c0_i32 = arith.constant 0 : i32
    %c0_i32_0 = arith.constant 0 : i32
    %c0_i32_1 = arith.constant 0 : i32
    return %c0_i32, %c0_i32_0 : i32, i32
  }
  func.func @transform_5(%arg0: i32, %arg1: i32) -> (i32, i32) {
    %c0_i32 = arith.constant 0 : i32
    return %arg1, %arg0 : i32, i32
  }
}

module attributes {stable_mosaic.version = 11 : i64} {
  func.func @_fused_linear_kernel(%arg0: i32, %arg1: i32, %arg2: memref<16x32xbf16, #tpu.memory_space<vmem>>, %arg3: memref<32x32xbf16, #tpu.memory_space<vmem>>, %arg4: memref<1x32xf32, #tpu.memory_space<vmem>>, %arg5: memref<16x32xf32, #tpu.memory_space<vmem>>, %arg6: memref<16x32xf32, #tpu.memory_space<vmem>>) attributes {dimension_semantics = [#tpu.dimension_semantics<parallel>, #tpu.dimension_semantics<parallel>], iteration_bounds = array<i64: 1, 1>, scalar_prefetch = 0 : i64, scratch_operands = 0 : i64, tpu.core_type = #tpu.core_type<tc>, window_params = [{transform_indices = @transform_0, window_bounds = array<i64: 16, 32>}, {transform_indices = @transform_1, window_bounds = array<i64: 32, 32>}, {transform_indices = @transform_2, window_bounds = array<i64: 1, 32>}, {transform_indices = @transform_3, window_bounds = array<i64: 16, 32>}, {transform_indices = @transform_4, window_bounds = array<i64: 16, 32>}]} {
    %c0 = arith.constant 0 : index
    %c0_0 = arith.constant 0 : index
    %0 = vector.load %arg2[%c0, %c0_0] : memref<16x32xbf16, #tpu.memory_space<vmem>>, vector<16x32xbf16>
    %c0_1 = arith.constant 0 : index
    %c0_2 = arith.constant 0 : index
    %1 = vector.load %arg3[%c0_1, %c0_2] : memref<32x32xbf16, #tpu.memory_space<vmem>>, vector<32x32xbf16>
    %cst = arith.constant dense<0.000000e+00> : vector<16x32xf32>
    %2 = tpu.matmul %0, %1, %cst {dimension_numbers = #tpu.dot_dimension_numbers<[1], [0], [0], [1], [0, 0, 1, 1], [], []>} : vector<16x32xbf16>, vector<32x32xbf16>, vector<16x32xf32> -> vector<16x32xf32>
    %c0_3 = arith.constant 0 : index
    %c0_4 = arith.constant 0 : index
    %3 = vector.load %arg4[%c0_3, %c0_4] : memref<1x32xf32, #tpu.memory_space<vmem>>, vector<1x32xf32>
    %4 = vector.broadcast %3 : vector<1x32xf32> to vector<16x32xf32>
    %5 = arith.addf %2, %4 : vector<16x32xf32>
    %c0_5 = arith.constant 0 : index
    %c0_6 = arith.constant 0 : index
    %6 = vector.load %arg5[%c0_5, %c0_6] : memref<16x32xf32, #tpu.memory_space<vmem>>, vector<16x32xf32>
    %7 = arith.addf %5, %6 : vector<16x32xf32>
    %c0_7 = arith.constant 0 : index
    %c0_8 = arith.constant 0 : index
    %8 = vector.load %arg6[%c0_7, %c0_8] : memref<16x32xf32, #tpu.memory_space<vmem>>, vector<16x32xf32>
    tpu.vector_store %arg6[%c0_7, %c0_8], %7 {strides = array<i32>} : memref<16x32xf32, #tpu.memory_space<vmem>>, vector<16x32xf32>,
    return
  }
  func.func @transform_0(%arg0: i32, %arg1: i32) -> (i32, i32) {
    %c0_i32 = arith.constant 0 : i32
    %c0_i32_0 = arith.constant 0 : i32
    return %arg1, %c0_i32 : i32, i32
  }
  func.func @transform_1(%arg0: i32, %arg1: i32) -> (i32, i32) {
    %c0_i32 = arith.constant 0 : i32
    %c0_i32_0 = arith.constant 0 : i32
    return %c0_i32, %arg0 : i32, i32
  }
  func.func @transform_2(%arg0: i32, %arg1: i32) -> (i32, i32) {
    %c0_i32 = arith.constant 0 : i32
    %c0_i32_0 = arith.constant 0 : i32
    return %c0_i32, %arg0 : i32, i32
  }
  func.func @transform_3(%arg0: i32, %arg1: i32) -> (i32, i32) {
    %c0_i32 = arith.constant 0 : i32
    return %arg1, %arg0 : i32, i32
  }
  func.func @transform_4(%arg0: i32, %arg1: i32) -> (i32, i32) {
    %c0_i32 = arith.constant 0 : i32
    return %arg1, %arg0 : i32, i32
  }
}

module attributes {stable_mosaic.version = 11 : i64} {
  func.func @_attention_kernel(%arg0: i32, %arg1: memref<1x4x8x8xbf16, #tpu.memory_space<vmem>>, %arg2: memref<1x4x8x8xbf16, #tpu.memory_space<vmem>>, %arg3: memref<1x4x8x8xbf16, #tpu.memory_space<vmem>>, %arg4: memref<1x8x32xbf16, #tpu.memory_space<vmem>>) attributes {dimension_semantics = [#tpu.dimension_semantics<parallel>], iteration_bounds = array<i64: 2>, scalar_prefetch = 0 : i64, scratch_operands = 0 : i64, tpu.core_type = #tpu.core_type<tc>, window_params = [{transform_indices = @transform_0, window_bounds = array<i64: 1, 4, 8, 8>}, {transform_indices = @transform_1, window_bounds = array<i64: 1, 4, 8, 8>}, {transform_indices = @transform_2, window_bounds = array<i64: 1, 4, 8, 8>}, {transform_indices = @transform_3, window_bounds = array<i64: 1, 8, 32>}]} {
    %c0 = arith.constant 0 : index
    %c0_0 = arith.constant 0 : index
    %c0_1 = arith.constant 0 : index
    %c0_2 = arith.constant 0 : index
    %0 = vector.load %arg1[%c0, %c0_0, %c0_1, %c0_2] : memref<1x4x8x8xbf16, #tpu.memory_space<vmem>>, vector<1x4x8x8xbf16>
    %1 = vector.shape_cast %0 : vector<1x4x8x8xbf16> to vector<4x8x8xbf16>
    %c0_3 = arith.constant 0 : index
    %c0_4 = arith.constant 0 : index
    %c0_5 = arith.constant 0 : index
    %c0_6 = arith.constant 0 : index
    %2 = vector.load %arg2[%c0_3, %c0_4, %c0_5, %c0_6] : memref<1x4x8x8xbf16, #tpu.memory_space<vmem>>, vector<1x4x8x8xbf16>
    %3 = vector.shape_cast %2 : vector<1x4x8x8xbf16> to vector<4x8x8xbf16>
    %c0_7 = arith.constant 0 : index
    %c0_8 = arith.constant 0 : index
    %c0_9 = arith.constant 0 : index
    %c0_10 = arith.constant 0 : index
    %4 = vector.load %arg3[%c0_7, %c0_8, %c0_9, %c0_10] : memref<1x4x8x8xbf16, #tpu.memory_space<vmem>>, vector<1x4x8x8xbf16>
    %5 = vector.shape_cast %4 : vector<1x4x8x8xbf16> to vector<4x8x8xbf16>
    "tpu.trace_start"() <{level = 10 : i32, message = "hqd,hkd->hqk"}> : () -> ()
    %cst = arith.constant dense<0.000000e+00> : vector<4x8x8xf32>
    %6 = tpu.matmul %1, %3, %cst {dimension_numbers = #tpu.dot_dimension_numbers<[2], [2], [1], [1], [0, 0, 0, 1, 1, 1], [0], [0]>} : vector<4x8x8xbf16>, vector<4x8x8xbf16>, vector<4x8x8xf32> -> vector<4x8x8xf32>
    "tpu.trace_stop"() : () -> ()
    %7 = tpu.iota {dimensions = array<i32: 0>} : vector<8x8xi32>
    %8 = tpu.iota {dimensions = array<i32: 1>} : vector<8x8xi32>
    %9 = arith.cmpi sle, %8, %7 : vector<8x8xi32>
    %10 = vector.shape_cast %9 : vector<8x8xi1> to vector<1x8x8xi1>
    %cst_11 = arith.constant -1.000000e+05 : f32
    %11 = vector.shape_cast %10 : vector<1x8x8xi1> to vector<1x8x8xi1>
    %12 = vector.broadcast %11 : vector<1x8x8xi1> to vector<4x8x8xi1>
    %13 = vector.broadcast %cst_11 : f32 to vector<4x8x8xf32>
    %14 = arith.select %12, %6, %13 : vector<4x8x8xi1>, vector<4x8x8xf32>
    %cst_12 = arith.constant 0.353553385 : f32
    %15 = vector.broadcast %cst_12 : f32 to vector<4x8x8xf32>
    %16 = arith.mulf %14, %15 : vector<4x8x8xf32>
    %cst_13 = arith.constant dense<0xFF800000> : vector<4x8xf32>
    %17 = vector.multi_reduction <maximumf>, %16, %cst_13 [2] : vector<4x8x8xf32> to vector<4x8xf32>
    %18 = vector.shape_cast %17 : vector<4x8xf32> to vector<4x8x1xf32>
    %19 = vector.broadcast %18 : vector<4x8x1xf32> to vector<4x8x8xf32>
    %20 = arith.subf %16, %19 : vector<4x8x8xf32>
    %21 = math.exp %20 : vector<4x8x8xf32>
    %cst_14 = arith.constant dense<0.000000e+00> : vector<4x8xf32>
    %22 = vector.multi_reduction <add>, %21, %cst_14 [2] : vector<4x8x8xf32> to vector<4x8xf32>
    %23 = vector.shape_cast %22 : vector<4x8xf32> to vector<4x8x1xf32>
    %24 = tpu.reciprocal %23 {approx = true} : vector<4x8x1xf32> -> vector<4x8x1xf32>
    %25 = vector.broadcast %24 : vector<4x8x1xf32> to vector<4x8x8xf32>
    %26 = arith.mulf %21, %25 : vector<4x8x8xf32>
    %27 = arith.truncf %26 : vector<4x8x8xf32> to vector<4x8x8xbf16>
    "tpu.trace_start"() <{level = 10 : i32, message = "hqk,hkd->hqd"}> : () -> ()
    %cst_15 = arith.constant dense<0.000000e+00> : vector<4x8x8xf32>
    %28 = tpu.matmul %27, %5, %cst_15 {dimension_numbers = #tpu.dot_dimension_numbers<[2], [1], [1], [2], [0, 0, 0, 1, 1, 2], [0], [0]>} : vector<4x8x8xbf16>, vector<4x8x8xbf16>, vector<4x8x8xf32> -> vector<4x8x8xf32>
    "tpu.trace_stop"() : () -> ()
    %29 = vector.extract_strided_slice %28 {offsets = [0, 0, 0], sizes = [1, 8, 8], strides = [1, 1, 1]} : vector<4x8x8xf32> to vector<1x8x8xf32>
    %30 = vector.shape_cast %29 : vector<1x8x8xf32> to vector<8x8xf32>
    %31 = vector.extract_strided_slice %28 {offsets = [1, 0, 0], sizes = [1, 8, 8], strides = [1, 1, 1]} : vector<4x8x8xf32> to vector<1x8x8xf32>
    %32 = vector.shape_cast %31 : vector<1x8x8xf32> to vector<8x8xf32>
    %33 = vector.extract_strided_slice %28 {offsets = [2, 0, 0], sizes = [1, 8, 8], strides = [1, 1, 1]} : vector<4x8x8xf32> to vector<1x8x8xf32>
    %34 = vector.shape_cast %33 : vector<1x8x8xf32> to vector<8x8xf32>
    %35 = vector.extract_strided_slice %28 {offsets = [3, 0, 0], sizes = [1, 8, 8], strides = [1, 1, 1]} : vector<4x8x8xf32> to vector<1x8x8xf32>
    %36 = vector.shape_cast %35 : vector<1x8x8xf32> to vector<8x8xf32>
    %37 = tpu.concatenate %30, %32, %34, %36 in 1 : vector<8x8xf32>, vector<8x8xf32>, vector<8x8xf32>, vector<8x8xf32> -> vector<8x32xf32>
    %38 = arith.truncf %37 : vector<8x32xf32> to vector<8x32xbf16>
    %c0_16 = arith.constant 0 : index
    %c0_17 = arith.constant 0 : index
    %c0_18 = arith.constant 0 : index
    %39 = vector.load %arg4[%c0_16, %c0_17, %c0_18] : memref<1x8x32xbf16, #tpu.memory_space<vmem>>, vector<1x8x32xbf16>
    %40 = vector.shape_cast %39 : vector<1x8x32xbf16> to vector<8x32xbf16>
    %41 = vector.shape_cast %38 : vector<8x32xbf16> to vector<1x8x32xbf16>
    tpu.vector_store %arg4[%c0_16, %c0_17, %c0_18], %41 {strides = array<i32>} : memref<1x8x32xbf16, #tpu.memory_space<vmem>>, vector<1x8x32xbf16>,
    return
  }
  func.func @transform_0(%arg0: i32) -> (i32, i32, i32, i32) {
    %c0_i32 = arith.constant 0 : i32
    %c0_i32_0 = arith.constant 0 : i32
    %c0_i32_1 = arith.constant 0 : i32
    %c0_i32_2 = arith.constant 0 : i32
    return %arg0, %c0_i32, %c0_i32_0, %c0_i32_1 : i32, i32, i32, i32
  }
  func.func @transform_1(%arg0: i32) -> (i32, i32, i32, i32) {
    %c0_i32 = arith.constant 0 : i32
    %c0_i32_0 = arith.constant 0 : i32
    %c0_i32_1 = arith.constant 0 : i32
    %c0_i32_2 = arith.constant 0 : i32
    return %arg0, %c0_i32, %c0_i32_0, %c0_i32_1 : i32, i32, i32, i32
  }
  func.func @transform_2(%arg0: i32) -> (i32, i32, i32, i32) {
    %c0_i32 = arith.constant 0 : i32
    %c0_i32_0 = arith.constant 0 : i32
    %c0_i32_1 = arith.constant 0 : i32
    %c0_i32_2 = arith.constant 0 : i32
    return %arg0, %c0_i32, %c0_i32_0, %c0_i32_1 : i32, i32, i32, i32
  }
  func.func @transform_3(%arg0: i32) -> (i32, i32, i32) {
    %c0_i32 = arith.constant 0 : i32
    %c0_i32_0 = arith.constant 0 : i32
    %c0_i32_1 = arith.constant 0 : i32
    return %arg0, %c0_i32, %c0_i32_0 : i32, i32, i32
  }
}

module attributes {stable_mosaic.version = 11 : i64} {
  func.func @_fused_linear_kernel(%arg0: i32, %arg1: i32, %arg2: memref<16x32xf32, #tpu.memory_space<vmem>>, %arg3: memref<32x128xbf16, #tpu.memory_space<vmem>>, %arg4: memref<1x128xf32, #tpu.memory_space<vmem>>, %arg5: memref<1x32xf32, #tpu.memory_space<vmem>>, %arg6: memref<1x32xf32, #tpu.memory_space<vmem>>, %arg7: memref<16x128xbf16, #tpu.memory_space<vmem>>) attributes {dimension_semantics = [#tpu.dimension_semantics<parallel>, #tpu.dimension_semantics<parallel>], iteration_bounds = array<i64: 1, 1>, scalar_prefetch = 0 : i64, scratch_operands = 0 : i64, tpu.core_type = #tpu.core_type<tc>, window_params = [{transform_indices = @transform_0, window_bounds = array<i64: 16, 32>}, {transform_indices = @transform_1, window_bounds = array<i64: 32, 128>}, {transform_indices = @transform_2, window_bounds = array<i64: 1, 128>}, {pipeline_mode = #tpu.pipeline_mode<synchronous>, transform_indices = @transform_3, window_bounds = array<i64: 1, 32>}, {pipeline_mode = #tpu.pipeline_mode<synchronous>, transform_indices = @transform_4, window_bounds = array<i64: 1, 32>}, {transform_indices = @transform_5, window_bounds = array<i64: 16, 128>}]} {
    %c0 = arith.constant 0 : index
    %c0_0 = arith.constant 0 : index
    %0 = vector.load %arg2[%c0, %c0_0] : memref<16x32xf32, #tpu.memory_space<vmem>>, vector<16x32xf32>
    %cst = arith.constant dense<0.000000e+00> : vector<16xf32>
    %1 = vector.multi_reduction <add>, %0, %cst [1] : vector<16x32xf32> to vector<16xf32>
    %2 = vector.shape_cast %1 : vector<16xf32> to vector<16x1xf32>
    %cst_1 = arith.constant 3.200000e+01 : f32
    %3 = vector.broadcast %cst_1 : f32 to vector<16x1xf32>
    %4 = arith.divf %2, %3 : vector<16x1xf32>
    %5 = vector.broadcast %4 : vector<16x1xf32> to vector<16x32xf32>
    %6 = arith.subf %0, %5 : vector<16x32xf32>
    %7 = arith.mulf %6, %6 : vector<16x32xf32>
    %cst_2 = arith.constant dense<0.000000e+00> : vector<16xf32>
    %8 = vector.multi_reduction <add>, %7, %cst_2 [1] : vector<16x32xf32> to vector<16xf32>
    %9 = vector.shape_cast %8 : vector<16xf32> to vector<16x1xf32>
    %cst_3 = arith.constant 3.200000e+01 : f32
    %10 = vector.broadcast %cst_3 : f32 to vector<16x1xf32>
    %11 = arith.divf %9, %10 : vector<16x1xf32>
    %12 = vector.broadcast %4 : vector<16x1xf32> to vector<16x32xf32>
    %13 = arith.subf %0, %12 : vector<16x32xf32>
    %cst_4 = arith.constant 9.99999974E-6 : f32
    %14 = vector.broadcast %cst_4 : f32 to vector<16x1xf32>
    %15 = arith.addf %11, %14 : vector<16x1xf32>
    %16 = math.rsqrt %15 : vector<16x1xf32>
    %17 = vector.broadcast %16 : vector<16x1xf32> to vector<16x32xf32>
    %18 = arith.mulf %13, %17 : vector<16x32xf32>
    %c0_5 = arith.constant 0 : index
    %c0_6 = arith.constant 0 : index
    %19 = vector.load %arg5[%c0_5, %c0_6] : memref<1x32xf32, #tpu.memory_space<vmem>>, vector<1x32xf32>
    %20 = vector.broadcast %19 : vector<1x32xf32> to vector<16x32xf32>
    %21 = arith.mulf %18, %20 : vector<16x32xf32>
    %c0_7 = arith.constant 0 : index
    %c0_8 = arith.constant 0 : index
    %22 = vector.load %arg6[%c0_7, %c0_8] : memref<1x32xf32, #tpu.memory_space<vmem>>, vector<1x32xf32>
    %23 = vector.broadcast %22 : vector<1x32xf32> to vector<16x32xf32>
    %24 = arith.addf %21, %23 : vector<16x32xf32>
    %25 = arith.truncf %24 : vector<16x32xf32> to vector<16x32xbf16>
    %c0_9 = arith.constant 0 : index
    %c0_10 = arith.constant 0 : index
    %26 = vector.load %arg3[%c0_9, %c0_10] : memref<32x128xbf16, #tpu.memory_space<vmem>>, vector<32x128xbf16>
    %cst_11 = arith.constant dense<0.000000e+00> : vector<16x128xf32>
    %27 = tpu.matmul %25, %26, %cst_11 {dimension_numbers = #tpu.dot_dimension_numbers<[1], [0], [0], [1], [0, 0, 1, 1], [], []>} : vector<16x32xbf16>, vector<32x128xbf16>, vector<16x128xf32> -> vector<16x128xf32>
    %c0_12 = arith.constant 0 : index
    %c0_13 = arith.constant 0 : index
    %28 = vector.load %arg4[%c0_12, %c0_13] : memref<1x128xf32, #tpu.memory_space<vmem>>, vector<1x128xf32>
    %29 = vector.broadcast %28 : vector<1x128xf32> to vector<16x128xf32>
    %30 = arith.addf %27, %29 : vector<16x128xf32>
    %31 = arith.mulf %30, %30 : vector<16x128xf32>
    %32 = arith.mulf %30, %31 : vector<16x128xf32>
    %cst_14 = arith.constant 4.471500e-02 : f32
    %33 = vector.broadcast %cst_14 : f32 to vector<16x128xf32>
    %34 = arith.mulf %33, %32 : vector<16x128xf32>
    %35 = arith.addf %30, %34 : vector<16x128xf32>
    %cst_15 = arith.constant 0.797884583 : f32
    %36 = vector.broadcast %cst_15 : f32 to vector<16x128xf32>
    %37 = arith.mulf %36, %35 : vector<16x128xf32>
    %38 = math.tanh %37 : vector<16x128xf32>
    %cst_16 = arith.constant 1.000000e+00 : f32
    %39 = vector.broadcast %cst_16 : f32 to vector<16x128xf32>
    %40 = arith.addf %39, %38 : vector<16x128xf32>
    %cst_17 = arith.constant 5.000000e-01 : f32
    %41 = vector.broadcast %cst_17 : f32 to vector<16x128xf32>
    %42 = arith.mulf %41, %40 : vector<16x128xf32>
    %43 = arith.mulf %30, %42 : vector<16x128xf32>
    %44 = arith.truncf %43 : vector<16x128xf32> to vector<16x128xbf16>
    %c0_18 = arith.constant 0 : index
    %c0_19 = arith.constant 0 : index
    %45 = vector.load %arg7[%c0_18, %c0_19] : memref<16x128xbf16, #tpu.memory_space<vmem>>, vector<16x128xbf16>
    tpu.vector_store %arg7[%c0_18, %c0_19], %44 {strides = array<i32>} : memref<16x128xbf16, #tpu.memory_space<vmem>>, vector<16x128xbf16>,
    return
  }
  func.func @transform_0(%arg0: i32, %arg1: i32) -> (i32, i32) {
    %c0_i32 = arith.constant 0 : i32
    %c0_i32_0 = arith.constant 0 : i32
    return %arg1, %c0_i32 : i32, i32
  }
  func.func @transform_1(%arg0: i32, %arg1: i32) -> (i32, i32) {
    %c0_i32 = arith.constant 0 : i32
    %c0_i32_0 = arith.constant 0 : i32
    return %c0_i32, %arg0 : i32, i32
  }
  func.func @transform_2(%arg0: i32, %arg1: i32) -> (i32, i32) {
    %c0_i32 = arith.constant 0 : i32
    %c0_i32_0 = arith.constant 0 : i32
    return %c0_i32, %arg0 : i32, i32
  }
  func.func @transform_3(%arg0: i32, %arg1: i32) -> (i32, i32) {
    %c0_i32 = arith.constant 0 : i32
    %c0_i32_0 = arith.constant 0 : i32
    %c0_i32_1 = arith.constant 0 : i32
    return %c0_i32, %c0_i32_0 : i32, i32
  }
  func.func @transform_4(%arg0: i32, %arg1: i32) -> (i32, i32) {
    %c0_i32 = arith.constant 0 : i32
    %c0_i32_0 = arith.constant 0 : i32
    %c0_i32_1 = arith.constant 0 : i32
    return %c0_i32, %c0_i32_0 : i32, i32
  }
  func.func @transform_5(%arg0: i32, %arg1: i32) -> (i32, i32) {
    %c0_i32 = arith.constant 0 : i32
    return %arg1, %arg0 : i32, i32
  }
}

module attributes {stable_mosaic.version = 11 : i64} {
  func.func @_fused_linear_kernel(%arg0: i32, %arg1: i32, %arg2: memref<16x128xbf16, #tpu.memory_space<vmem>>, %arg3: memref<128x32xbf16, #tpu.memory_space<vmem>>, %arg4: memref<1x32xf32, #tpu.memory_space<vmem>>, %arg5: memref<16x32xf32, #tpu.memory_space<vmem>>, %arg6: memref<16x32xf32, #tpu.memory_space<vmem>>) attributes {dimension_semantics = [#tpu.dimension_semantics<parallel>, #tpu.dimension_semantics<parallel>], iteration_bounds = array<i64: 1, 1>, scalar_prefetch = 0 : i64, scratch_operands = 0 : i64, tpu.core_type = #tpu.core_type<tc>, window_params = [{transform_indices = @transform_0, window_bounds = array<i64: 16, 128>}, {transform_indices = @transform_1, window_bounds = array<i64: 128, 32>}, {transform_indices = @transform_2, window_bounds = array<i64: 1, 32>}, {transform_indices = @transform_3, window_bounds = array<i64: 16, 32>}, {transform_indices = @transform_4, window_bounds = array<i64: 16, 32>}]} {
    %c0 = arith.constant 0 : index
    %c0_0 = arith.constant 0 : index
    %0 = vector.load %arg2[%c0, %c0_0] : memref<16x128xbf16, #tpu.memory_space<vmem>>, vector<16x128xbf16>
    %c0_1 = arith.constant 0 : index
    %c0_2 = arith.constant 0 : index
    %1 = vector.load %arg3[%c0_1, %c0_2] : memref<128x32xbf16, #tpu.memory_space<vmem>>, vector<128x32xbf16>
    %cst = arith.constant dense<0.000000e+00> : vector<16x32xf32>
    %2 = tpu.matmul %0, %1, %cst {dimension_numbers = #tpu.dot_dimension_numbers<[1], [0], [0], [1], [0, 0, 1, 1], [], []>} : vector<16x128xbf16>, vector<128x32xbf16>, vector<16x32xf32> -> vector<16x32xf32>
    %c0_3 = arith.constant 0 : index
    %c0_4 = arith.constant 0 : index
    %3 = vector.load %arg4[%c0_3, %c0_4] : memref<1x32xf32, #tpu.memory_space<vmem>>, vector<1x32xf32>
    %4 = vector.broadcast %3 : vector<1x32xf32> to vector<16x32xf32>
    %5 = arith.addf %2, %4 : vector<16x32xf32>
    %c0_5 = arith.constant 0 : index
    %c0_6 = arith.constant 0 : index
    %6 = vector.load %arg5[%c0_5, %c0_6] : memref<16x32xf32, #tpu.memory_space<vmem>>, vector<16x32xf32>
    %7 = arith.addf %5, %6 : vector<16x32xf32>
    %c0_7 = arith.constant 0 : index
    %c0_8 = arith.constant 0 : index
    %8 = vector.load %arg6[%c0_7, %c0_8] : memref<16x32xf32, #tpu.memory_space<vmem>>, vector<16x32xf32>
    tpu.vector_store %arg6[%c0_7, %c0_8], %7 {strides = array<i32>} : memref<16x32xf32, #tpu.memory_space<vmem>>, vector<16x32xf32>,
    return
  }
  func.func @transform_0(%arg0: i32, %arg1: i32) -> (i32, i32) {
    %c0_i32 = arith.constant 0 : i32
    %c0_i32_0 = arith.constant 0 : i32
    return %arg1, %c0_i32 : i32, i32
  }
  func.func @transform_1(%arg0: i32, %arg1: i32) -> (i32, i32) {
    %c0_i32 = arith.constant 0 : i32
    %c0_i32_0 = arith.constant 0 : i32
    return %c0_i32, %arg0 : i32, i32
  }
  func.func @transform_2(%arg0: i32, %arg1: i32) -> (i32, i32) {
    %c0_i32 = arith.constant 0 : i32
    %c0_i32_0 = arith.constant 0 : i32
    return %c0_i32, %arg0 : i32, i32
  }
  func.func @transform_3(%arg0: i32, %arg1: i32) -> (i32, i32) {
    %c0_i32 = arith.constant 0 : i32
    return %arg1, %arg0 : i32, i32
  }
  func.func @transform_4(%arg0: i32, %arg1: i32) -> (i32, i32) {
    %c0_i32 = arith.constant 0 : i32
    return %arg1, %arg0 : i32, i32
  }
}

module attributes {stable_mosaic.version = 11 : i64} {
  func.func @_fused_linear_kernel(%arg0: i32, %arg1: i32, %arg2: memref<16x32xf32, #tpu.memory_space<vmem>>, %arg3: memref<64x32xbf16, #tpu.memory_space<vmem>>, %arg4: memref<16x64xf32, #tpu.memory_space<vmem>>) attributes {dimension_semantics = [#tpu.dimension_semantics<parallel>, #tpu.dimension_semantics<parallel>], iteration_bounds = array<i64: 1, 1>, scalar_prefetch = 0 : i64, scratch_operands = 0 : i64, tpu.core_type = #tpu.core_type<tc>, window_params = [{transform_indices = @transform_0, window_bounds = array<i64: 16, 32>}, {transform_indices = @transform_1, window_bounds = array<i64: 64, 32>}, {transform_indices = @transform_2, window_bounds = array<i64: 16, 64>}]} {
    %c0 = arith.constant 0 : index
    %c0_0 = arith.constant 0 : index
    %0 = vector.load %arg2[%c0, %c0_0] : memref<16x32xf32, #tpu.memory_space<vmem>>, vector<16x32xf32>
    %1 = arith.truncf %0 : vector<16x32xf32> to vector<16x32xbf16>
    %c0_1 = arith.constant 0 : index
    %c0_2 = arith.constant 0 : index
    %2 = vector.load %arg3[%c0_1, %c0_2] : memref<64x32xbf16, #tpu.memory_space<vmem>>, vector<64x32xbf16>
    %cst = arith.constant dense<0.000000e+00> : vector<16x64xf32>
    %3 = tpu.matmul %1, %2, %cst {dimension_numbers = #tpu.dot_dimension_numbers<[1], [1], [0], [0], [0, 0, 1, 0], [], []>} : vector<16x32xbf16>, vector<64x32xbf16>, vector<16x64xf32> -> vector<16x64xf32>
    %c0_3 = arith.constant 0 : index
    %c0_4 = arith.constant 0 : index
    %4 = vector.load %arg4[%c0_3, %c0_4] : memref<16x64xf32, #tpu.memory_space<vmem>>, vector<16x64xf32>
    tpu.vector_store %arg4[%c0_3, %c0_4], %3 {strides = array<i32>} : memref<16x64xf32, #tpu.memory_space<vmem>>, vector<16x64xf32>,
    return
  }
  func.func @transform_0(%arg0: i32, %arg1: i32) -> (i32, i32) {
    %c0_i32 = arith.constant 0 : i32
    %c0_i32_0 = arith.constant 0 : i32
    return %arg1, %c0_i32 : i32, i32
  }
  func.func @transform_1(%arg0: i32, %arg1: i32) -> (i32, i32) {
    %c0_i32 = arith.constant 0 : i32
    %c0_i32_0 = arith.constant 0 : i32
    return %arg0, %c0_i32 : i32, i32
  }
  func.func @transform_2(%arg0: i32, %arg1: i32) -> (i32, i32) {
    %c0_i32 = arith.constant 0 : i32
    return %arg1, %arg0 : i32, i32
  }
}

</mosaic_0001>

<llo_original>
// kernel: _lambda_.13
$region0: #{_lambda_.13}
  #allocation0 [shape = 'u32[]', space=smem, size = 0x4, offset = 0x4, fixed_abs, tag = 'smem constant byte address 0x4 - core index']
  #allocation1 [shape = 'u32[144,128]{1,0:T(1,128)}', space=vmem, size = 0x12000, scoped, tag = 'internal scratch']
  %s0 = inlined_call_operand.vmem [shape: bf16[16,32], index: 0, kind: input, shape index: {}]
  %s1 = inlined_call_operand.vmem [shape: bf16[32,32], index: 1, kind: input, shape index: {}]
  %s2 = inlined_call_operand.vmem [shape: f32[1,32], index: 2, kind: input, shape index: {}]
  %s3 = inlined_call_operand.vmem [shape: f32[16,32], index: 3, kind: input, shape index: {}]
  %s4 = inlined_call_operand.vmem [shape: f32[16,32], index: 4, kind: output, shape index: {}]
  %s5 = sld [smem:[#allocation0]]
  $region26: #{_lambda_.13} parent=0
    _
  %s7 = ssub.s32 1, %s5
  %s8 = scalar_select 0, %s7, %s5
  // Predicated region
  $region2: #{_lambda_.13} parent=0 // pred_check
    _
  $region3: #{_lambda_.13} parent=0 // pred_check_branch
    %10 = sbr.rel (0) target = $region5
  $region4: #{_lambda_.13} parent=0 // pred_region
    _
  $region5: #{_lambda_.13} parent=0 // pred_fallthru
    _
  // Predicated region
  $region6: #{_lambda_.13} parent=0 // pred_check
    _
  $region7: #{_lambda_.13} parent=0 // pred_check_branch
    %12 = sbr.rel (0) target = $region9
  $region8: #{_lambda_.13} parent=0 // pred_region
    _
  $region9: #{_lambda_.13} parent=0 // pred_fallthru
    _
  // Predicated region
  $region10: #{_lambda_.13} parent=0 // pred_check
    _
  $region11: #{_lambda_.13} parent=0 // pred_check_branch
    %14 = sbr.rel (0) target = $region13
  $region12: #{_lambda_.13} parent=0 // pred_region
    _
  $region13: #{_lambda_.13} parent=0 // pred_fallthru
    _
  // Predicated region
  $region14: #{_lambda_.13} parent=0 // pred_check
    _
  $region15: #{_lambda_.13} parent=0 // pred_check_branch
    %16 = sbr.rel (0) target = $region17
  $region16: #{_lambda_.13} parent=0 // pred_region
    _
  $region17: #{_lambda_.13} parent=0 // pred_fallthru
    _
  %v18 = vld [vmem:[%s0] sm:$0xf]
  %v19 = vld [vmem:[%s0 + $0x4] sm:$0xf]
  %v20 = vld [vmem:[%s1] sm:$0xf]
  %v21 = vld [vmem:[%s1 + $0x4] sm:$0xf]
  %v22 = vld [vmem:[%s1 + $0x8] sm:$0xf]
  %v23 = vld [vmem:[%s1 + $0xc] sm:$0xf]
  %v24 = vld [vmem:[%s2] sm:$0x1]
  %v26 = vlaneseq
  %v27 = vshrl.u32 %v26, 7
  %v28 = vsub.s32 0, %v27
  %v29 = vrot.slane %v24, %v28
  %v33 = vunpack.c.l.b16 %v18
  %v34 = vunpack.c.l.b16 %v19
  %v35 = vpack.c.b16 %v34, %v33
  %v40 = vunpack.c.l.b16 %v20
  %v41 = vunpack.c.l.b16 %v21
  %v42 = vunpack.c.l.b16 %v22
  %v43 = vunpack.c.l.b16 %v23
  %v44 = vpack.c.b16 %v41, %v40
  %v45 = vpack.c.b16 %v43, %v42
  %vm48 = vcmask 261120
  %v50 = vsel %vm48, %v35, 0
  %52 = vmatprep.subr.bf16.mxu0 0
  %53 = vmatpush1.bf16.msra.mxu0 0
  %54 = vmatprep.subr.bf16.mxu0 0
  %55 = vmatpush1.bf16.msra.mxu0 0
  %56 = vmatprep.subr.bf16.mxu0 0
  %57 = vmatpush1.bf16.msra.mxu0 0
  %58 = vmatprep.subr.bf16.mxu0 0
  %59 = vmatpush1.bf16.msra.mxu0 0
  %60 = vmatprep.subr.bf16.mxu0 0
  %61 = vmatpush1.bf16.msra.mxu0 0
  %62 = vmatprep.subr.bf16.mxu0 0
  %63 = vmatpush1.bf16.msra.mxu0 0
  %64 = vmatprep.subr.bf16.mxu0 0
  %65 = vmatpush1.bf16.msra.mxu0 %v45
  %66 = vmatprep.subr.bf16.mxu0 0
  %67 = vmatpush1.bf16.msra.mxu0 %v44
  %68 = vmatprep.subr.bf16.mxu0 0
  %69 = vmatpush2.bf16.msra.mxu0 0
  %70 = vmatprep.subr.bf16.mxu0 0
  %71 = vmatpush2.bf16.msra.mxu0 0
  %72 = vmatprep.subr.bf16.mxu0 0
  %73 = vmatpush2.bf16.msra.mxu0 0
  %74 = vmatprep.subr.bf16.mxu0 0
  %75 = vmatpush2.bf16.msra.mxu0 0
  %76 = vmatprep.subr.bf16.mxu0 0
  %77 = vmatpush2.bf16.msra.mxu0 0
  %78 = vmatprep.subr.bf16.mxu0 0
  %79 = vmatpush2.bf16.msra.mxu0 0
  %80 = vmatprep.subr.bf16.mxu0 0
  %81 = vmatpush2.bf16.msra.mxu0 0
  %82 = vmatprep.subr.bf16.mxu0 0
  %83 = vmatpush2.bf16.msra.mxu0 0
  %84 = vmatprep.mubr.bf16.mxu0 0
  %85 = vmatmul.mubr.bf16.gmra.mxu0 %v50
  %v86 = vpop.f32.mrf.mxu0
  %v87 = vadd.f32 %v29, %v86
  %v88 = vpop.f32.mrf.mxu0
  %v89 = vpop.f32.mrf.mxu0
  %v90 = vadd.f32 %v29, %v89
  %v91 = vpop.f32.mrf.mxu0
  %92 = vdwg.mxu0
  %v93 = vld [vmem:[%s3] sm:$0xff]
  %v94 = vld [vmem:[%s3 + $0x8] sm:$0xff]
  %v95 = vadd.f32 %v87, %v93
  %v96 = vadd.f32 %v90, %v94
  %97 = vst.msk [vmem:[%s4] sm:$0xff] %vm48, %v95
  %98 = vst.msk [vmem:[%s4 + $0x8] sm:$0xff] %vm48, %v96
  // Predicated region
  $region18: #{_lambda_.13} parent=0 // pred_check
    _
  $region19: #{_lambda_.13} parent=0 // pred_check_branch
    %100 = sbr.rel (0) target = $region21
  $region20: #{_lambda_.13} parent=0 // pred_region
    _
  $region21: #{_lambda_.13} parent=0 // pred_fallthru
    _
  // Predicated region
  $region22: #{_lambda_.13} parent=0 // pred_check
    _
  $region23: #{_lambda_.13} parent=0 // pred_check_branch
    %102 = sbr.rel (0) target = $region25
  $region24: #{_lambda_.13} parent=0 // pred_region
    _
  $region25: #{_lambda_.13} parent=0 // pred_fallthru
    _

// kernel: _lambda_.11
$region0: #{_lambda_.11}
  #allocation0 [shape = 'u32[]', space=smem, size = 0x4, offset = 0x4, fixed_abs, tag = 'smem constant byte address 0x4 - core index']
  #allocation1 [shape = 'u32[144,128]{1,0:T(1,128)}', space=vmem, size = 0x12000, scoped, tag = 'internal scratch']
  %s0 = inlined_call_operand.vmem [shape: f32[16,32], index: 0, kind: input, shape index: {}]
  %s1 = inlined_call_operand.vmem [shape: bf16[32,96], index: 1, kind: input, shape index: {}]
  %s2 = inlined_call_operand.vmem [shape: f32[1,96], index: 2, kind: input, shape index: {}]
  %s3 = inlined_call_operand.vmem [shape: f32[1,32], index: 3, kind: input, shape index: {}]
  %s4 = inlined_call_operand.vmem [shape: f32[1,32], index: 4, kind: input, shape index: {}]
  %s5 = inlined_call_operand.vmem [shape: bf16[16,96], index: 5, kind: output, shape index: {}]
  %s6 = sld [smem:[#allocation0]]
  $region30: #{_lambda_.11} parent=0
    _
  %s8 = ssub.s32 1, %s6
  %s9 = scalar_select 0, %s8, %s6
  // Predicated region
  $region2: #{_lambda_.11} parent=0 // pred_check
    _
  $region3: #{_lambda_.11} parent=0 // pred_check_branch
    %11 = sbr.rel (0) target = $region5
  $region4: #{_lambda_.11} parent=0 // pred_region
    _
  $region5: #{_lambda_.11} parent=0 // pred_fallthru
    _
  // Predicated region
  $region6: #{_lambda_.11} parent=0 // pred_check
    _
  $region7: #{_lambda_.11} parent=0 // pred_check_branch
    %13 = sbr.rel (0) target = $region9
  $region8: #{_lambda_.11} parent=0 // pred_region
    _
  $region9: #{_lambda_.11} parent=0 // pred_fallthru
    _
  // Predicated region
  $region10: #{_lambda_.11} parent=0 // pred_check
    _
  $region11: #{_lambda_.11} parent=0 // pred_check_branch
    %15 = sbr.rel (0) target = $region13
  $region12: #{_lambda_.11} parent=0 // pred_region
    _
  $region13: #{_lambda_.11} parent=0 // pred_fallthru
    _
  // Predicated region
  $region14: #{_lambda_.11} parent=0 // pred_check
    _
  $region15: #{_lambda_.11} parent=0 // pred_check_branch
    %17 = sbr.rel (0) target = $region17
  $region16: #{_lambda_.11} parent=0 // pred_region
    _
  $region17: #{_lambda_.11} parent=0 // pred_fallthru
    _
  // Predicated region
  $region18: #{_lambda_.11} parent=0 // pred_check
    _
  $region19: #{_lambda_.11} parent=0 // pred_check_branch
    %19 = sbr.rel (0) target = $region21
  $region20: #{_lambda_.11} parent=0 // pred_region
    _
  $region21: #{_lambda_.11} parent=0 // pred_fallthru
    _
  %v21 = vld [vmem:[%s0] sm:$0xff]
  %v22 = vld [vmem:[%s0 + $0x8] sm:$0xff]
  %vm23 = vcmask 261120
  %v24 = vsel %vm23, %v21, 0.0
  %25 = vadd.xlane.f32.xlu0 %v24
  %v26 = vpop.xlane.xlu0 %25
  %v27 = vsel %vm23, %v22, 0.0
  %28 = vadd.xlane.f32.xlu0 %v27
  %v29 = vpop.xlane.xlu0 %28
  %v30 = vrcp.pop 32.0
  %v31 = vmul.f32 %v26, %v30
  %v32 = vmul.f32 %v29, %v30
  %v33 = vsub.f32 %v21, %v31
  %v34 = vsub.f32 %v22, %v32
  %v35 = vmul.f32 %v33, %v33
  %v36 = vmul.f32 %v34, %v34
  %v37 = vsel %vm23, %v35, 0.0
  %38 = vadd.xlane.f32.xlu0 %v37
  %v39 = vpop.xlane.xlu0 %38
  %v40 = vsel %vm23, %v36, 0.0
  %41 = vadd.xlane.f32.xlu0 %v40
  %v42 = vpop.xlane.xlu0 %41
  %v43 = vmul.f32 %v39, %v30
  %v44 = vmul.f32 %v42, %v30
  %v45 = vadd.f32 %v43, 1e-05
  %v46 = vadd.f32 %v44, 1e-05
  %v47 = vrsqrt.pop %v45
  %v48 = vrsqrt.pop %v46
  %v49 = vmul.f32 %v33, %v47
  %v50 = vmul.f32 %v34, %v48
  %v51 = vld [vmem:[%s3] sm:$0x1]
  %v53 = vlaneseq
  %v54 = vshrl.u32 %v53, 7
  %v55 = vsub.s32 0, %v54
  %v56 = vrot.slane %v51, %v55
  %v58 = vmul.f32 %v49, %v56
  %v59 = vmul.f32 %v50, %v56
  %v60 = vld [vmem:[%s4] sm:$0x1]
  %v62 = vlaneseq
  %v63 = vshrl.u32 %v62, 7
  %v64 = vsub.s32 0, %v63
  %v65 = vrot.slane %v60, %v64
  %v67 = vadd.f32 %v58, %v65
  %v68 = vadd.f32 %v59, %v65
  %v69 = vpack.c.bf16 %v68, %v67
  %v70 = vld [vmem:[%s1] sm:$0xf]
  %v71 = vld [vmem:[%s1 + $0x4] sm:$0xf]
  %v72 = vld [vmem:[%s1 + $0x8] sm:$0xf]
  %v73 = vld [vmem:[%s1 + $0xc] sm:$0xf]
  %v74 = vld [vmem:[%s2] sm:$0x1]
  %v76 = vlaneseq
  %v77 = vshrl.u32 %v76, 7
  %v78 = vsub.s32 0, %v77
  %v79 = vrot.slane %v74, %v78
  %v85 = vunpack.c.l.b16 %v70
  %v86 = vunpack.c.l.b16 %v71
  %v87 = vunpack.c.l.b16 %v72
  %v88 = vunpack.c.l.b16 %v73
  %v89 = vpack.c.b16 %v86, %v85
  %v90 = vpack.c.b16 %v88, %v87
  %v94 = vsel %vm23, %v69, 0
  %96 = vmatprep.subr.bf16.mxu0 0
  %97 = vmatpush1.bf16.msra.mxu0 0
  %98 = vmatprep.subr.bf16.mxu0 0
  %99 = vmatpush1.bf16.msra.mxu0 0
  %100 = vmatprep.subr.bf16.mxu0 0
  %101 = vmatpush1.bf16.msra.mxu0 0
  %102 = vmatprep.subr.bf16.mxu0 0
  %103 = vmatpush1.bf16.msra.mxu0 0
  %104 = vmatprep.subr.bf16.mxu0 0
  %105 = vmatpush1.bf16.msra.mxu0 0
  %106 = vmatprep.subr.bf16.mxu0 0
  %107 = vmatpush1.bf16.msra.mxu0 0
  %108 = vmatprep.subr.bf16.mxu0 0
  %109 = vmatpush1.bf16.msra.mxu0 %v90
  %110 = vmatprep.subr.bf16.mxu0 0
  %111 = vmatpush1.bf16.msra.mxu0 %v89
  %112 = vmatprep.subr.bf16.mxu0 0
  %113 = vmatpush2.bf16.msra.mxu0 0
  %114 = vmatprep.subr.bf16.mxu0 0
  %115 = vmatpush2.bf16.msra.mxu0 0
  %116 = vmatprep.subr.bf16.mxu0 0
  %117 = vmatpush2.bf16.msra.mxu0 0
  %118 = vmatprep.subr.bf16.mxu0 0
  %119 = vmatpush2.bf16.msra.mxu0 0
  %120 = vmatprep.subr.bf16.mxu0 0
  %121 = vmatpush2.bf16.msra.mxu0 0
  %122 = vmatprep.subr.bf16.mxu0 0
  %123 = vmatpush2.bf16.msra.mxu0 0
  %124 = vmatprep.subr.bf16.mxu0 0
  %125 = vmatpush2.bf16.msra.mxu0 0
  %126 = vmatprep.subr.bf16.mxu0 0
  %127 = vmatpush2.bf16.msra.mxu0 0
  %128 = vmatprep.mubr.bf16.mxu0 0
  %129 = vmatmul.mubr.bf16.gmra.mxu0 %v94
  %v130 = vpop.f32.mrf.mxu0
  %v131 = vadd.f32 %v79, %v130
  %v132 = vpop.f32.mrf.mxu0
  %v133 = vpop.f32.mrf.mxu0
  %v134 = vadd.f32 %v79, %v133
  %v135 = vpop.f32.mrf.mxu0
  %136 = vdwg.mxu0
  %v137 = vpack.c.bf16 %v134, %v131
  %v139 = vunpack.c.l.b16 %v137
  %v140 = vunpack.c.h.b16 %v137
  %v141 = vpack.c.b16 %v139, %v139
  %v142 = vpack.c.b16 %v140, %v140
  %vm145 = vcmask 781312
  %146 = vst.msk [vmem:[%s5] sm:$0xf] %vm145, %v141
  %147 = vst.msk [vmem:[%s5 + $0x4] sm:$0xf] %vm145, %v142
  // Predicated region
  $region22: #{_lambda_.11} parent=0 // pred_check
    _
  $region23: #{_lambda_.11} parent=0 // pred_check_branch
    %149 = sbr.rel (0) target = $region25
  $region24: #{_lambda_.11} parent=0 // pred_region
    _
  $region25: #{_lambda_.11} parent=0 // pred_fallthru
    _
  // Predicated region
  $region26: #{_lambda_.11} parent=0 // pred_check
    _
  $region27: #{_lambda_.11} parent=0 // pred_check_branch
    %151 = sbr.rel (0) target = $region29
  $region28: #{_lambda_.11} parent=0 // pred_region
    _
  $region29: #{_lambda_.11} parent=0 // pred_fallthru
    _

// kernel: _lambda_.14
$region0: #{_lambda_.14}
  #allocation0 [shape = 'u32[]', space=smem, size = 0x4, offset = 0x4, fixed_abs, tag = 'smem constant byte address 0x4 - core index']
  #allocation1 [shape = 'u32[144,128]{1,0:T(1,128)}', space=vmem, size = 0x12000, scoped, tag = 'internal scratch']
  %s0 = inlined_call_operand.vmem [shape: f32[16,32], index: 0, kind: input, shape index: {}]
  %s1 = inlined_call_operand.vmem [shape: bf16[32,128], index: 1, kind: input, shape index: {}]
  %s2 = inlined_call_operand.vmem [shape: f32[1,128], index: 2, kind: input, shape index: {}]
  %s3 = inlined_call_operand.vmem [shape: f32[1,32], index: 3, kind: input, shape index: {}]
  %s4 = inlined_call_operand.vmem [shape: f32[1,32], index: 4, kind: input, shape index: {}]
  %s5 = inlined_call_operand.vmem [shape: bf16[16,128], index: 5, kind: output, shape index: {}]
  %s6 = sld [smem:[#allocation0]]
  $region30: #{_lambda_.14} parent=0
    _
  %s8 = ssub.s32 1, %s6
  %s9 = scalar_select 0, %s8, %s6
  // Predicated region
  $region2: #{_lambda_.14} parent=0 // pred_check
    _
  $region3: #{_lambda_.14} parent=0 // pred_check_branch
    %11 = sbr.rel (0) target = $region5
  $region4: #{_lambda_.14} parent=0 // pred_region
    _
  $region5: #{_lambda_.14} parent=0 // pred_fallthru
    _
  // Predicated region
  $region6: #{_lambda_.14} parent=0 // pred_check
    _
  $region7: #{_lambda_.14} parent=0 // pred_check_branch
    %13 = sbr.rel (0) target = $region9
  $region8: #{_lambda_.14} parent=0 // pred_region
    _
  $region9: #{_lambda_.14} parent=0 // pred_fallthru
    _
  // Predicated region
  $region10: #{_lambda_.14} parent=0 // pred_check
    _
  $region11: #{_lambda_.14} parent=0 // pred_check_branch
    %15 = sbr.rel (0) target = $region13
  $region12: #{_lambda_.14} parent=0 // pred_region
    _
  $region13: #{_lambda_.14} parent=0 // pred_fallthru
    _
  // Predicated region
  $region14: #{_lambda_.14} parent=0 // pred_check
    _
  $region15: #{_lambda_.14} parent=0 // pred_check_branch
    %17 = sbr.rel (0) target = $region17
  $region16: #{_lambda_.14} parent=0 // pred_region
    _
  $region17: #{_lambda_.14} parent=0 // pred_fallthru
    _
  // Predicated region
  $region18: #{_lambda_.14} parent=0 // pred_check
    _
  $region19: #{_lambda_.14} parent=0 // pred_check_branch
    %19 = sbr.rel (0) target = $region21
  $region20: #{_lambda_.14} parent=0 // pred_region
    _
  $region21: #{_lambda_.14} parent=0 // pred_fallthru
    _
  %v21 = vld [vmem:[%s0] sm:$0xff]
  %v22 = vld [vmem:[%s0 + $0x8] sm:$0xff]
  %vm23 = vcmask 261120
  %v24 = vsel %vm23, %v21, 0.0
  %25 = vadd.xlane.f32.xlu0 %v24
  %v26 = vpop.xlane.xlu0 %25
  %v27 = vsel %vm23, %v22, 0.0
  %28 = vadd.xlane.f32.xlu0 %v27
  %v29 = vpop.xlane.xlu0 %28
  %v30 = vrcp.pop 32.0
  %v31 = vmul.f32 %v26, %v30
  %v32 = vmul.f32 %v29, %v30
  %v33 = vsub.f32 %v21, %v31
  %v34 = vsub.f32 %v22, %v32
  %v35 = vmul.f32 %v33, %v33
  %v36 = vmul.f32 %v34, %v34
  %v37 = vsel %vm23, %v35, 0.0
  %38 = vadd.xlane.f32.xlu0 %v37
  %v39 = vpop.xlane.xlu0 %38
  %v40 = vsel %vm23, %v36, 0.0
  %41 = vadd.xlane.f32.xlu0 %v40
  %v42 = vpop.xlane.xlu0 %41
  %v43 = vmul.f32 %v39, %v30
  %v44 = vmul.f32 %v42, %v30
  %v45 = vadd.f32 %v43, 1e-05
  %v46 = vadd.f32 %v44, 1e-05
  %v47 = vrsqrt.pop %v45
  %v48 = vrsqrt.pop %v46
  %v49 = vmul.f32 %v33, %v47
  %v50 = vmul.f32 %v34, %v48
  %v51 = vld [vmem:[%s3] sm:$0x1]
  %v53 = vlaneseq
  %v54 = vshrl.u32 %v53, 7
  %v55 = vsub.s32 0, %v54
  %v56 = vrot.slane %v51, %v55
  %v58 = vmul.f32 %v49, %v56
  %v59 = vmul.f32 %v50, %v56
  %v60 = vld [vmem:[%s4] sm:$0x1]
  %v62 = vlaneseq
  %v63 = vshrl.u32 %v62, 7
  %v64 = vsub.s32 0, %v63
  %v65 = vrot.slane %v60, %v64
  %v67 = vadd.f32 %v58, %v65
  %v68 = vadd.f32 %v59, %v65
  %v69 = vpack.c.bf16 %v68, %v67
  %v70 = vld [vmem:[%s1] sm:$0xf]
  %v71 = vld [vmem:[%s1 + $0x4] sm:$0xf]
  %v72 = vld [vmem:[%s1 + $0x8] sm:$0xf]
  %v73 = vld [vmem:[%s1 + $0xc] sm:$0xf]
  %v74 = vld [vmem:[%s2] sm:$0x1]
  %v76 = vlaneseq
  %v77 = vshrl.u32 %v76, 7
  %v78 = vsub.s32 0, %v77
  %v79 = vrot.slane %v74, %v78
  %v85 = vunpack.c.l.b16 %v70
  %v86 = vunpack.c.l.b16 %v71
  %v87 = vunpack.c.l.b16 %v72
  %v88 = vunpack.c.l.b16 %v73
  %v89 = vpack.c.b16 %v86, %v85
  %v90 = vpack.c.b16 %v88, %v87
  %v94 = vsel %vm23, %v69, 0
  %96 = vmatprep.subr.bf16.mxu0 0
  %97 = vmatpush1.bf16.msra.mxu0 0
  %98 = vmatprep.subr.bf16.mxu0 0
  %99 = vmatpush1.bf16.msra.mxu0 0
  %100 = vmatprep.subr.bf16.mxu0 0
  %101 = vmatpush1.bf16.msra.mxu0 0
  %102 = vmatprep.subr.bf16.mxu0 0
  %103 = vmatpush1.bf16.msra.mxu0 0
  %104 = vmatprep.subr.bf16.mxu0 0
  %105 = vmatpush1.bf16.msra.mxu0 0
  %106 = vmatprep.subr.bf16.mxu0 0
  %107 = vmatpush1.bf16.msra.mxu0 0
  %108 = vmatprep.subr.bf16.mxu0 0
  %109 = vmatpush1.bf16.msra.mxu0 %v90
  %110 = vmatprep.subr.bf16.mxu0 0
  %111 = vmatpush1.bf16.msra.mxu0 %v89
  %112 = vmatprep.subr.bf16.mxu0 0
  %113 = vmatpush2.bf16.msra.mxu0 0
  %114 = vmatprep.subr.bf16.mxu0 0
  %115 = vmatpush2.bf16.msra.mxu0 0
  %116 = vmatprep.subr.bf16.mxu0 0
  %117 = vmatpush2.bf16.msra.mxu0 0
  %118 = vmatprep.subr.bf16.mxu0 0
  %119 = vmatpush2.bf16.msra.mxu0 0
  %120 = vmatprep.subr.bf16.mxu0 0
  %121 = vmatpush2.bf16.msra.mxu0 0
  %122 = vmatprep.subr.bf16.mxu0 0
  %123 = vmatpush2.bf16.msra.mxu0 0
  %124 = vmatprep.subr.bf16.mxu0 0
  %125 = vmatpush2.bf16.msra.mxu0 0
  %126 = vmatprep.subr.bf16.mxu0 0
  %127 = vmatpush2.bf16.msra.mxu0 0
  %128 = vmatprep.mubr.bf16.mxu0 0
  %129 = vmatmul.mubr.bf16.gmra.mxu0 %v94
  %v130 = vpop.f32.mrf.mxu0
  %v131 = vadd.f32 %v79, %v130
  %v132 = vpop.f32.mrf.mxu0
  %v133 = vpop.f32.mrf.mxu0
  %v134 = vadd.f32 %v79, %v133
  %v135 = vpop.f32.mrf.mxu0
  %136 = vdwg.mxu0
  %v137 = vmul.f32 %v131, %v131
  %v138 = vmul.f32 %v134, %v134
  %v139 = vmul.f32 %v131, %v137
  %v140 = vmul.f32 %v134, %v138
  %v141 = vmul.f32 %v139, 0.044715
  %v142 = vmul.f32 %v140, 0.044715
  %v143 = vadd.f32 %v131, %v141
  %v144 = vadd.f32 %v134, %v142
  %v145 = vmul.f32 %v143, 0.7978846
  %v146 = vmul.f32 %v144, 0.7978846
  %v147 = vtanh.pop %v145
  %v148 = vtanh.pop %v146
  %v149 = vadd.f32 %v147, 1.0
  %v150 = vadd.f32 %v148, 1.0
  %v151 = vmul.f32 %v149, 0.5
  %v152 = vmul.f32 %v150, 0.5
  %v153 = vmul.f32 %v131, %v151
  %v154 = vmul.f32 %v134, %v152
  %v155 = vpack.c.bf16 %v154, %v153
  %v157 = vunpack.c.l.b16 %v155
  %v158 = vunpack.c.h.b16 %v155
  %v159 = vpack.c.b16 %v157, %v157
  %v160 = vpack.c.b16 %v158, %v158
  %163 = vst [vmem:[%s5] sm:$0xf] %v159
  %164 = vst [vmem:[%s5 + $0x4] sm:$0xf] %v160
  // Predicated region
  $region22: #{_lambda_.14} parent=0 // pred_check
    _
  $region23: #{_lambda_.14} parent=0 // pred_check_branch
    %166 = sbr.rel (0) target = $region25
  $region24: #{_lambda_.14} parent=0 // pred_region
    _
  $region25: #{_lambda_.14} parent=0 // pred_fallthru
    _
  // Predicated region
  $region26: #{_lambda_.14} parent=0 // pred_check
    _
  $region27: #{_lambda_.14} parent=0 // pred_check_branch
    %168 = sbr.rel (0) target = $region29
  $region28: #{_lambda_.14} parent=0 // pred_region
    _
  $region29: #{_lambda_.14} parent=0 // pred_fallthru
    _

// kernel: _lambda_.12
$region0: #{_lambda_.12}
  #allocation0 [shape = 'u32[]', space=smem, size = 0x4, offset = 0x4, fixed_abs, tag = 'smem constant byte address 0x4 - core index']
  #allocation1 [shape = 'u32[144,128]{1,0:T(1,128)}', space=vmem, size = 0x12000, scoped, tag = 'internal scratch']
  %s0 = inlined_call_operand.vmem [shape: bf16[2,4,8,8], index: 0, kind: input, shape index: {}]
  %s1 = inlined_call_operand.vmem [shape: bf16[2,4,8,8], index: 1, kind: input, shape index: {}]
  %s2 = inlined_call_operand.vmem [shape: bf16[2,4,8,8], index: 2, kind: input, shape index: {}]
  %s3 = inlined_call_operand.vmem [shape: bf16[2,8,32], index: 3, kind: output, shape index: {}]
  %s4 = sld [smem:[#allocation0]]
  $region45: #{_lambda_.12} parent=0
    _
  %s6 = ssub.s32 1, %s4
  %s7 = scalar_select 0, %s6, %s4
  loop: start=0, step=1, limit=4
  $region2: #{_lambda_.12} parent=0 // loop_pre_header
    _
  $region3: #{_lambda_.12} parent=0 // loop_header
    %s9 = sphi 0, %s13
    %p10 = scmp.ge.s32.totalorder %s9, 4
    %s19 = sphi 0, %s21
    %s22 = sphi 0, %s19
    %s23 = sphi 0, %s22
    %s39 = sphi 0, %s23
    %s45 = sphi 0, %s47
    %s48 = sphi 0, %s45
    %s49 = sphi 0, %s48
    %s65 = sphi 0, %s49
    %s71 = sphi 0, %s73
    %s74 = sphi 0, %s71
    %s75 = sphi 0, %s74
    %s91 = sphi 0, %s75
    %s97 = sphi 0, %s99
    %s100 = sphi 0, %s97
    %s101 = sphi 0, %s100
    %s117 = sphi 0, %s101
  $region4: #{_lambda_.12} parent=0 // loop_header_branch
    %12 = sbr.rel (%p10) target = $region8
  $region5: #{_lambda_.12} parent=0 // loop_body
    %s14 = ssub.s32 %s9, 1
    %s15 = ssub.s32 %s9, 2
    %s16 = sadd.s32 %s9, 1
    %s17 = ssub.s32 %s9, %s16
    %p18 = scmp.eq.s32.totalorder %s17, 0
    %s20 = sadd.s32 %s19, 1
    %s21 = scalar_select %p18, %s19, %s20
    %p24 = pneg %p18
    %p25 = scmp.eq.s32.totalorder %s9, 1
    %p26 = por %p24, %p25
    %p27 = scmp.ne.s32.totalorder %s19, %s22
    %p28 = scmp.eq.s32.totalorder %s9, 0
    %p29 = por %p27, %p28
    %p30 = scmp.ne.s32.totalorder %s19, %s22
    %p31 = scmp.eq.s32.totalorder %s14, 1
    %p32 = por %p30, %p31
    %p33 = scmp.ne.s32.totalorder %s22, %s23
    %p34 = scmp.eq.s32.totalorder %s14, 0
    %p35 = por %p33, %p34
    %p36 = scmp.ne.s32.totalorder %s22, %s23
    %p37 = scmp.eq.s32.totalorder %s15, 1
    %p38 = por %p36, %p37
    %p40 = scmp.ne.s32.totalorder %s23, %s39
    %p41 = scmp.eq.s32.totalorder %s15, 0
    %p42 = por %p40, %p41
    %s43 = ssub.s32 %s9, %s16
    %p44 = scmp.eq.s32.totalorder %s43, 0
    %s46 = sadd.s32 %s45, 1
    %s47 = scalar_select %p44, %s45, %s46
    %p50 = pneg %p44
    %p51 = scmp.eq.s32.totalorder %s9, 1
    %p52 = por %p50, %p51
    %p53 = scmp.ne.s32.totalorder %s45, %s48
    %p54 = scmp.eq.s32.totalorder %s9, 0
    %p55 = por %p53, %p54
    %p56 = scmp.ne.s32.totalorder %s45, %s48
    %p57 = scmp.eq.s32.totalorder %s14, 1
    %p58 = por %p56, %p57
    %p59 = scmp.ne.s32.totalorder %s48, %s49
    %p60 = scmp.eq.s32.totalorder %s14, 0
    %p61 = por %p59, %p60
    %p62 = scmp.ne.s32.totalorder %s48, %s49
    %p63 = scmp.eq.s32.totalorder %s15, 1
    %p64 = por %p62, %p63
    %p66 = scmp.ne.s32.totalorder %s49, %s65
    %p67 = scmp.eq.s32.totalorder %s15, 0
    %p68 = por %p66, %p67
    %s69 = ssub.s32 %s9, %s16
    %p70 = scmp.eq.s32.totalorder %s69, 0
    %s72 = sadd.s32 %s71, 1
    %s73 = scalar_select %p70, %s71, %s72
    %p76 = pneg %p70
    %p77 = scmp.eq.s32.totalorder %s9, 1
    %p78 = por %p76, %p77
    %p79 = scmp.ne.s32.totalorder %s71, %s74
    %p80 = scmp.eq.s32.totalorder %s9, 0
    %p81 = por %p79, %p80
    %p82 = scmp.ne.s32.totalorder %s71, %s74
    %p83 = scmp.eq.s32.totalorder %s14, 1
    %p84 = por %p82, %p83
    %p85 = scmp.ne.s32.totalorder %s74, %s75
    %p86 = scmp.eq.s32.totalorder %s14, 0
    %p87 = por %p85, %p86
    %p88 = scmp.ne.s32.totalorder %s74, %s75
    %p89 = scmp.eq.s32.totalorder %s15, 1
    %p90 = por %p88, %p89
    %p92 = scmp.ne.s32.totalorder %s75, %s91
    %p93 = scmp.eq.s32.totalorder %s15, 0
    %p94 = por %p92, %p93
    %s95 = ssub.s32 %s9, %s16
    %p96 = scmp.eq.s32.totalorder %s95, 0
    %s98 = sadd.s32 %s97, 1
    %s99 = scalar_select %p96, %s97, %s98
    %p102 = pneg %p96
    %p103 = scmp.eq.s32.totalorder %s9, 1
    %p104 = por %p102, %p103
    %p105 = scmp.ne.s32.totalorder %s97, %s100
    %p106 = scmp.eq.s32.totalorder %s9, 0
    %p107 = por %p105, %p106
    %p108 = scmp.ne.s32.totalorder %s97, %s100
    %p109 = scmp.eq.s32.totalorder %s14, 1
    %p110 = por %p108, %p109
    %p111 = scmp.ne.s32.totalorder %s100, %s101
    %p112 = scmp.eq.s32.totalorder %s14, 0
    %p113 = por %p111, %p112
    %p114 = scmp.ne.s32.totalorder %s100, %s101
    %p115 = scmp.eq.s32.totalorder %s15, 1
    %p116 = por %p114, %p115
    %p118 = scmp.ne.s32.totalorder %s101, %s117
    %p119 = scmp.eq.s32.totalorder %s15, 0
    %p120 = por %p118, %p119
    %p121 = scmp.le.s32.totalorder 1, %s9
    %p122 = scmp.lt.s32.totalorder %s9, 3
    %p123 = pnand %p121, %p122
    %p124 = pneg %p123
    // Predicated region
    $region9: #{_lambda_.12} parent=5 // pred_check
      _
    $region10: #{_lambda_.12} parent=5 // pred_check_branch
      %126 = sbr.rel (%p123) target = $region12
    $region11: #{_lambda_.12} parent=5 // pred_region
      %s127 = ssub.s32 %s9, 1
    $region12: #{_lambda_.12} parent=5 // pred_fallthru
      _
    %p128 = scmp.lt.s32.totalorder %s9, 2
    // Predicated region
    $region13: #{_lambda_.12} parent=5 // pred_check
      %p129 = pneg %p128
    $region14: #{_lambda_.12} parent=5 // pred_check_branch
      %131 = sbr.rel (%p129) target = $region16
    $region15: #{_lambda_.12} parent=5 // pred_region
      // Predicated region
      $region17: #{_lambda_.12} parent=15 // pred_check
        %p132 = pneg %p29
      $region18: #{_lambda_.12} parent=15 // pred_check_branch
        %134 = sbr.rel (%p132) target = $region20
      $region19: #{_lambda_.12} parent=15 // pred_region
        %p135 = scmp.lt.s32.totalorder %s9, 1
        %s136 = scalar_select %p135, %s9, 1
        %s137 = smul.addr %s136, 4
        %s138 = smul.addr %s137, 4
        %s139 = scalar_lea.vmem %s0, %s138
      $region20: #{_lambda_.12} parent=15 // pred_fallthru
        _
      // Predicated region
      $region21: #{_lambda_.12} parent=15 // pred_check
        %p140 = pneg %p55
      $region22: #{_lambda_.12} parent=15 // pred_check_branch
        %142 = sbr.rel (%p140) target = $region24
      $region23: #{_lambda_.12} parent=15 // pred_region
        %p143 = scmp.lt.s32.totalorder %s9, 1
        %s144 = scalar_select %p143, %s9, 1
        %s145 = smul.addr %s144, 4
        %s146 = smul.addr %s145, 4
        %s147 = scalar_lea.vmem %s1, %s146
      $region24: #{_lambda_.12} parent=15 // pred_fallthru
        _
      // Predicated region
      $region25: #{_lambda_.12} parent=15 // pred_check
        %p148 = pneg %p81
      $region26: #{_lambda_.12} parent=15 // pred_check_branch
        %150 = sbr.rel (%p148) target = $region28
      $region27: #{_lambda_.12} parent=15 // pred_region
        %p151 = scmp.lt.s32.totalorder %s9, 1
        %s152 = scalar_select %p151, %s9, 1
        %s153 = smul.addr %s152, 4
        %s154 = smul.addr %s153, 4
        %s155 = scalar_lea.vmem %s2, %s154
      $region28: #{_lambda_.12} parent=15 // pred_fallthru
        _
    $region16: #{_lambda_.12} parent=5 // pred_fallthru
      _
    %p156 = scmp.le.s32.totalorder 1, %s9
    %p157 = scmp.lt.s32.totalorder %s9, 3
    %p158 = pnand %p156, %p157
    %p159 = pneg %p158
    // Predicated region
    $region29: #{_lambda_.12} parent=5 // pred_check
      _
    $region30: #{_lambda_.12} parent=5 // pred_check_branch
      %161 = sbr.rel (%p158) target = $region32
    $region31: #{_lambda_.12} parent=5 // pred_region
      %s162 = ssub.s32 %s9, 1
      %p163 = scmp.lt.s32.totalorder %s14, 1
      %s164 = scalar_select %p163, %s14, 1
      %s165 = smul.addr %s164, 4
      %s166 = smul.addr %s165, 4
      %s167 = scalar_lea.vmem %s0, %s166
      %p168 = pneg %p35
      %p169 = pneg %p32
      %p170 = scmp.lt.s32.totalorder %s14, 1
      %s171 = scalar_select %p170, %s14, 1
      %s172 = smul.addr %s171, 4
      %s173 = smul.addr %s172, 4
      %s174 = scalar_lea.vmem %s1, %s173
      %p175 = pneg %p61
      %p176 = pneg %p58
      %p177 = scmp.lt.s32.totalorder %s14, 1
      %s178 = scalar_select %p177, %s14, 1
      %s179 = smul.addr %s178, 4
      %s180 = smul.addr %s179, 4
      %s181 = scalar_lea.vmem %s2, %s180
      %p182 = pneg %p87
      %p183 = pneg %p84
      %p184 = pneg %p113
      %p185 = pneg %p110
      %p186 = scmp.lt.s32.totalorder %s14, 1
      %s187 = scalar_select %p186, %s14, 1
      %s188 = smul.addr %s187, 4
      %s189 = scalar_lea.vmem %s3, %s188
      %p190 = scmp.lt.s32.totalorder %s14, 1
      %s191 = scalar_select %p190, %s14, 1
      %s192 = smul.addr %s191, 4
      %s193 = smul.addr %s192, 4
      %s194 = scalar_lea.vmem %s0, %s193
      %p195 = scmp.lt.s32.totalorder %s14, 1
      %s196 = scalar_select %p195, %s14, 1
      %s197 = smul.addr %s196, 4
      %s198 = smul.addr %s197, 4
      %s199 = scalar_lea.vmem %s1, %s198
      %p200 = scmp.lt.s32.totalorder %s14, 1
      %s201 = scalar_select %p200, %s14, 1
      %s202 = smul.addr %s201, 4
      %s203 = smul.addr %s202, 4
      %s204 = scalar_lea.vmem %s2, %s203
      %p205 = scmp.lt.s32.totalorder %s14, 1
      %s206 = scalar_select %p205, %s14, 1
      %s207 = smul.addr %s206, 4
      %s208 = scalar_lea.vmem %s3, %s207
      %v210 = vld [vmem:[%s194] sm:$0xf]
      %v211 = vld [vmem:[%s194 + $0x4] sm:$0xf]
      %v212 = vld [vmem:[%s194 + $0x8] sm:$0xf]
      %v213 = vld [vmem:[%s194 + $0xc] sm:$0xf]
      %v214 = vld [vmem:[%s199] sm:$0xf]
      %v215 = vld [vmem:[%s199 + $0x4] sm:$0xf]
      %v216 = vld [vmem:[%s199 + $0x8] sm:$0xf]
      %v217 = vld [vmem:[%s199 + $0xc] sm:$0xf]
      %v218 = vld [vmem:[%s204] sm:$0xf]
      %v219 = vld [vmem:[%s204 + $0x4] sm:$0xf]
      %v220 = vld [vmem:[%s204 + $0x8] sm:$0xf]
      %v221 = vld [vmem:[%s204 + $0xc] sm:$0xf]
      %vm222 = vcmask 64512
      %v224 = vsel %vm222, %v210, 0
      %v227 = vsel %vm222, %v214, 0
      %229 = vmatprep.subr.bf16.mxu0 0
      %230 = vmatpush1.bf16.xpose.msra.mxu0 0
      %231 = vmatprep.subr.bf16.mxu0 0
      %232 = vmatpush1.bf16.xpose.msra.mxu0 0
      %233 = vmatprep.subr.bf16.mxu0 0
      %234 = vmatpush1.bf16.xpose.msra.mxu0 0
      %235 = vmatprep.subr.bf16.mxu0 0
      %236 = vmatpush1.bf16.xpose.msra.mxu0 0
      %237 = vmatprep.subr.bf16.mxu0 0
      %238 = vmatpush1.bf16.xpose.msra.mxu0 0
      %239 = vmatprep.subr.bf16.mxu0 0
      %240 = vmatpush1.bf16.xpose.msra.mxu0 0
      %241 = vmatprep.subr.bf16.mxu0 0
      %242 = vmatpush1.bf16.xpose.msra.mxu0 0
      %243 = vmatprep.subr.bf16.mxu0 0
      %244 = vmatpush1.bf16.xpose.msra.mxu0 %v227
      %245 = vmatprep.subr.bf16.mxu0 0
      %246 = vmatpush2.bf16.xpose.msra.mxu0 0
      %247 = vmatprep.subr.bf16.mxu0 0
      %248 = vmatpush2.bf16.xpose.msra.mxu0 0
      %249 = vmatprep.subr.bf16.mxu0 0
      %250 = vmatpush2.bf16.xpose.msra.mxu0 0
      %251 = vmatprep.subr.bf16.mxu0 0
      %252 = vmatpush2.bf16.xpose.msra.mxu0 0
      %253 = vmatprep.subr.bf16.mxu0 0
      %254 = vmatpush2.bf16.xpose.msra.mxu0 0
      %255 = vmatprep.subr.bf16.mxu0 0
      %256 = vmatpush2.bf16.xpose.msra.mxu0 0
      %257 = vmatprep.subr.bf16.mxu0 0
      %258 = vmatpush2.bf16.xpose.msra.mxu0 0
      %259 = vmatprep.subr.bf16.mxu0 0
      %260 = vmatpush2.bf16.xpose.msra.mxu0 0
      %261 = vmatprep.mubr.bf16.mxu0 0
      %262 = vmatmul.mubr.bf16.gmra.mxu0 %v224
      %v263 = vpop.f32.mrf.mxu0
      %v264 = vadd.f32 0.0, %v263
      %v265 = vpop.f32.mrf.mxu0
      %v266 = vpop.f32.mrf.mxu0
      %v267 = vpop.f32.mrf.mxu0
      %268 = vdwg.mxu0
      %v270 = vsel %vm222, %v211, 0
      %v273 = vsel %vm222, %v215, 0
      %275 = vmatprep.subr.bf16.mxu0 0
      %276 = vmatpush1.bf16.xpose.msra.mxu0 0
      %277 = vmatprep.subr.bf16.mxu0 0
      %278 = vmatpush1.bf16.xpose.msra.mxu0 0
      %279 = vmatprep.subr.bf16.mxu0 0
      %280 = vmatpush1.bf16.xpose.msra.mxu0 0
      %281 = vmatprep.subr.bf16.mxu0 0
      %282 = vmatpush1.bf16.xpose.msra.mxu0 0
      %283 = vmatprep.subr.bf16.mxu0 0
      %284 = vmatpush1.bf16.xpose.msra.mxu0 0
      %285 = vmatprep.subr.bf16.mxu0 0
      %286 = vmatpush1.bf16.xpose.msra.mxu0 0
      %287 = vmatprep.subr.bf16.mxu0 0
      %288 = vmatpush1.bf16.xpose.msra.mxu0 0
      %289 = vmatprep.subr.bf16.mxu0 0
      %290 = vmatpush1.bf16.xpose.msra.mxu0 %v273
      %291 = vmatprep.subr.bf16.mxu0 0
      %292 = vmatpush2.bf16.xpose.msra.mxu0 0
      %293 = vmatprep.subr.bf16.mxu0 0
      %294 = vmatpush2.bf16.xpose.msra.mxu0 0
      %295 = vmatprep.subr.bf16.mxu0 0
      %296 = vmatpush2.bf16.xpose.msra.mxu0 0
      %297 = vmatprep.subr.bf16.mxu0 0
      %298 = vmatpush2.bf16.xpose.msra.mxu0 0
      %299 = vmatprep.subr.bf16.mxu0 0
      %300 = vmatpush2.bf16.xpose.msra.mxu0 0
      %301 = vmatprep.subr.bf16.mxu0 0
      %302 = vmatpush2.bf16.xpose.msra.mxu0 0
      %303 = vmatprep.subr.bf16.mxu0 0
      %304 = vmatpush2.bf16.xpose.msra.mxu0 0
      %305 = vmatprep.subr.bf16.mxu0 0
      %306 = vmatpush2.bf16.xpose.msra.mxu0 0
      %307 = vmatprep.mubr.bf16.mxu0 0
      %308 = vmatmul.mubr.bf16.gmra.mxu0 %v270
      %v309 = vpop.f32.mrf.mxu0
      %v310 = vadd.f32 0.0, %v309
      %v311 = vpop.f32.mrf.mxu0
      %v312 = vpop.f32.mrf.mxu0
      %v313 = vpop.f32.mrf.mxu0
      %314 = vdwg.mxu0
      %v316 = vsel %vm222, %v212, 0
      %v319 = vsel %vm222, %v216, 0
      %321 = vmatprep.subr.bf16.mxu0 0
      %322 = vmatpush1.bf16.xpose.msra.mxu0 0
      %323 = vmatprep.subr.bf16.mxu0 0
      %324 = vmatpush1.bf16.xpose.msra.mxu0 0
      %325 = vmatprep.subr.bf16.mxu0 0
      %326 = vmatpush1.bf16.xpose.msra.mxu0 0
      %327 = vmatprep.subr.bf16.mxu0 0
      %328 = vmatpush1.bf16.xpose.msra.mxu0 0
      %329 = vmatprep.subr.bf16.mxu0 0
      %330 = vmatpush1.bf16.xpose.msra.mxu0 0
      %331 = vmatprep.subr.bf16.mxu0 0
      %332 = vmatpush1.bf16.xpose.msra.mxu0 0
      %333 = vmatprep.subr.bf16.mxu0 0
      %334 = vmatpush1.bf16.xpose.msra.mxu0 0
      %335 = vmatprep.subr.bf16.mxu0 0
      %336 = vmatpush1.bf16.xpose.msra.mxu0 %v319
      %337 = vmatprep.subr.bf16.mxu0 0
      %338 = vmatpush2.bf16.xpose.msra.mxu0 0
      %339 = vmatprep.subr.bf16.mxu0 0
      %340 = vmatpush2.bf16.xpose.msra.mxu0 0
      %341 = vmatprep.subr.bf16.mxu0 0
      %342 = vmatpush2.bf16.xpose.msra.mxu0 0
      %343 = vmatprep.subr.bf16.mxu0 0
      %344 = vmatpush2.bf16.xpose.msra.mxu0 0
      %345 = vmatprep.subr.bf16.mxu0 0
      %346 = vmatpush2.bf16.xpose.msra.mxu0 0
      %347 = vmatprep.subr.bf16.mxu0 0
      %348 = vmatpush2.bf16.xpose.msra.mxu0 0
      %349 = vmatprep.subr.bf16.mxu0 0
      %350 = vmatpush2.bf16.xpose.msra.mxu0 0
      %351 = vmatprep.subr.bf16.mxu0 0
      %352 = vmatpush2.bf16.xpose.msra.mxu0 0
      %353 = vmatprep.mubr.bf16.mxu0 0
      %354 = vmatmul.mubr.bf16.gmra.mxu0 %v316
      %v355 = vpop.f32.mrf.mxu0
      %v356 = vadd.f32 0.0, %v355
      %v357 = vpop.f32.mrf.mxu0
      %v358 = vpop.f32.mrf.mxu0
      %v359 = vpop.f32.mrf.mxu0
      %360 = vdwg.mxu0
      %v362 = vsel %vm222, %v213, 0
      %v365 = vsel %vm222, %v217, 0
      %367 = vmatprep.subr.bf16.mxu0 0
      %368 = vmatpush1.bf16.xpose.msra.mxu0 0
      %369 = vmatprep.subr.bf16.mxu0 0
      %370 = vmatpush1.bf16.xpose.msra.mxu0 0
      %371 = vmatprep.subr.bf16.mxu0 0
      %372 = vmatpush1.bf16.xpose.msra.mxu0 0
      %373 = vmatprep.subr.bf16.mxu0 0
      %374 = vmatpush1.bf16.xpose.msra.mxu0 0
      %375 = vmatprep.subr.bf16.mxu0 0
      %376 = vmatpush1.bf16.xpose.msra.mxu0 0
      %377 = vmatprep.subr.bf16.mxu0 0
      %378 = vmatpush1.bf16.xpose.msra.mxu0 0
      %379 = vmatprep.subr.bf16.mxu0 0
      %380 = vmatpush1.bf16.xpose.msra.mxu0 0
      %381 = vmatprep.subr.bf16.mxu0 0
      %382 = vmatpush1.bf16.xpose.msra.mxu0 %v365
      %383 = vmatprep.subr.bf16.mxu0 0
      %384 = vmatpush2.bf16.xpose.msra.mxu0 0
      %385 = vmatprep.subr.bf16.mxu0 0
      %386 = vmatpush2.bf16.xpose.msra.mxu0 0
      %387 = vmatprep.subr.bf16.mxu0 0
      %388 = vmatpush2.bf16.xpose.msra.mxu0 0
      %389 = vmatprep.subr.bf16.mxu0 0
      %390 = vmatpush2.bf16.xpose.msra.mxu0 0
      %391 = vmatprep.subr.bf16.mxu0 0
      %392 = vmatpush2.bf16.xpose.msra.mxu0 0
      %393 = vmatprep.subr.bf16.mxu0 0
      %394 = vmatpush2.bf16.xpose.msra.mxu0 0
      %395 = vmatprep.subr.bf16.mxu0 0
      %396 = vmatpush2.bf16.xpose.msra.mxu0 0
      %397 = vmatprep.subr.bf16.mxu0 0
      %398 = vmatpush2.bf16.xpose.msra.mxu0 0
      %399 = vmatprep.mubr.bf16.mxu0 0
      %400 = vmatmul.mubr.bf16.gmra.mxu0 %v362
      %v401 = vpop.f32.mrf.mxu0
      %v402 = vadd.f32 0.0, %v401
      %v403 = vpop.f32.mrf.mxu0
      %v404 = vpop.f32.mrf.mxu0
      %v405 = vpop.f32.mrf.mxu0
      %406 = vdwg.mxu0
      %v407 = vlaneseq
      %v408 = vshrl.u32 %v407, 7
      %v409 = vlaneseq
      %v410 = vand.u32 %v409, 127
      %vm411 = vcmp.le.s32.totalorder %v410, %v408
      %v412 = vsel %vm411, 1, 0
      %vm413 = vcmp.eq.s32.totalorder %v412, 1
      %v414 = vsel %vm413, %v264, -100000.0
      %v415 = vsel %vm413, %v310, -100000.0
      %v416 = vsel %vm413, %v356, -100000.0
      %v417 = vsel %vm413, %v402, -100000.0
      %v418 = vmul.f32 %v414, 0.35355338
      %v419 = vmul.f32 %v415, 0.35355338
      %v420 = vmul.f32 %v416, 0.35355338
      %v421 = vmul.f32 %v417, 0.35355338
      %v422 = vsel %vm222, %v418, -inf
      %423 = vmax.xlane.f32.xlu0 %v422
      %v424 = vpop.xlane.xlu0 %423
      %v425 = vsel %vm222, %v419, -inf
      %426 = vmax.xlane.f32.xlu0 %v425
      %v427 = vpop.xlane.xlu0 %426
      %v428 = vsel %vm222, %v420, -inf
      %429 = vmax.xlane.f32.xlu0 %v428
      %v430 = vpop.xlane.xlu0 %429
      %v431 = vsel %vm222, %v421, -inf
      %432 = vmax.xlane.f32.xlu0 %v431
      %v433 = vpop.xlane.xlu0 %432
      %v434 = vsub.f32 %v418, %v424
      %v435 = vsub.f32 %v419, %v427
      %v436 = vsub.f32 %v420, %v430
      %v437 = vsub.f32 %v421, %v433
      %v438 = vmul.f32 %v434, 1.442695
      %v439 = vpow.pop %v438
      %v440 = vmul.f32 %v435, 1.442695
      %v441 = vpow.pop %v440
      %v442 = vmul.f32 %v436, 1.442695
      %v443 = vpow.pop %v442
      %v444 = vmul.f32 %v437, 1.442695
      %v445 = vpow.pop %v444
      %v446 = vsel %vm222, %v439, 0.0
      %447 = vadd.xlane.f32.xlu0 %v446
      %v448 = vpop.xlane.xlu0 %447
      %v449 = vsel %vm222, %v441, 0.0
      %450 = vadd.xlane.f32.xlu0 %v449
      %v451 = vpop.xlane.xlu0 %450
      %v452 = vsel %vm222, %v443, 0.0
      %453 = vadd.xlane.f32.xlu0 %v452
      %v454 = vpop.xlane.xlu0 %453
      %v455 = vsel %vm222, %v445, 0.0
      %456 = vadd.xlane.f32.xlu0 %v455
      %v457 = vpop.xlane.xlu0 %456
      %v458 = vrcp.pop %v448
      %v459 = vrcp.pop %v451
      %v460 = vrcp.pop %v454
      %v461 = vrcp.pop %v457
      %v462 = vmul.f32 %v439, %v458
      %v463 = vmul.f32 %v441, %v459
      %v464 = vmul.f32 %v443, %v460
      %v465 = vmul.f32 %v445, %v461
      %v466 = vpack.c.bf16 %v462, %v462
      %v467 = vpack.c.bf16 %v463, %v463
      %v468 = vpack.c.bf16 %v464, %v464
      %v469 = vpack.c.bf16 %v465, %v465
      %v471 = vsel %vm222, %v466, 0
      %vm473 = vcmask 1043456
      %v475 = vsel %vm473, %v218, 0
      %477 = vmatprep.subr.bf16.mxu0 0
      %478 = vmatpush1.bf16.msra.mxu0 0
      %479 = vmatprep.subr.bf16.mxu0 0
      %480 = vmatpush1.bf16.msra.mxu0 0
      %481 = vmatprep.subr.bf16.mxu0 0
      %482 = vmatpush1.bf16.msra.mxu0 0
      %483 = vmatprep.subr.bf16.mxu0 0
      %484 = vmatpush1.bf16.msra.mxu0 0
      %485 = vmatprep.subr.bf16.mxu0 0
      %486 = vmatpush1.bf16.msra.mxu0 0
      %487 = vmatprep.subr.bf16.mxu0 0
      %488 = vmatpush1.bf16.msra.mxu0 0
      %489 = vmatprep.subr.bf16.mxu0 0
      %490 = vmatpush1.bf16.msra.mxu0 0
      %491 = vmatprep.subr.bf16.mxu0 0
      %492 = vmatpush1.bf16.msra.mxu0 %v475
      %493 = vmatprep.subr.bf16.mxu0 0
      %494 = vmatpush2.bf16.msra.mxu0 0
      %495 = vmatprep.subr.bf16.mxu0 0
      %496 = vmatpush2.bf16.msra.mxu0 0
      %497 = vmatprep.subr.bf16.mxu0 0
      %498 = vmatpush2.bf16.msra.mxu0 0
      %499 = vmatprep.subr.bf16.mxu0 0
      %500 = vmatpush2.bf16.msra.mxu0 0
      %501 = vmatprep.subr.bf16.mxu0 0
      %502 = vmatpush2.bf16.msra.mxu0 0
      %503 = vmatprep.subr.bf16.mxu0 0
      %504 = vmatpush2.bf16.msra.mxu0 0
      %505 = vmatprep.subr.bf16.mxu0 0
      %506 = vmatpush2.bf16.msra.mxu0 0
      %507 = vmatprep.subr.bf16.mxu0 0
      %508 = vmatpush2.bf16.msra.mxu0 0
      %509 = vmatprep.mubr.bf16.mxu0 0
      %510 = vmatmul.mubr.bf16.gmra.mxu0 %v471
      %v511 = vpop.f32.mrf.mxu0
      %v512 = vadd.f32 0.0, %v511
      %v513 = vpop.f32.mrf.mxu0
      %v514 = vpop.f32.mrf.mxu0
      %v515 = vpop.f32.mrf.mxu0
      %516 = vdwg.mxu0
      %v518 = vsel %vm222, %v467, 0
      %v521 = vsel %vm473, %v219, 0
      %523 = vmatprep.subr.bf16.mxu0 0
      %524 = vmatpush1.bf16.msra.mxu0 0
      %525 = vmatprep.subr.bf16.mxu0 0
      %526 = vmatpush1.bf16.msra.mxu0 0
      %527 = vmatprep.subr.bf16.mxu0 0
      %528 = vmatpush1.bf16.msra.mxu0 0
      %529 = vmatprep.subr.bf16.mxu0 0
      %530 = vmatpush1.bf16.msra.mxu0 0
      %531 = vmatprep.subr.bf16.mxu0 0
      %532 = vmatpush1.bf16.msra.mxu0 0
      %533 = vmatprep.subr.bf16.mxu0 0
      %534 = vmatpush1.bf16.msra.mxu0 0
      %535 = vmatprep.subr.bf16.mxu0 0
      %536 = vmatpush1.bf16.msra.mxu0 0
      %537 = vmatprep.subr.bf16.mxu0 0
      %538 = vmatpush1.bf16.msra.mxu0 %v521
      %539 = vmatprep.subr.bf16.mxu0 0
      %540 = vmatpush2.bf16.msra.mxu0 0
      %541 = vmatprep.subr.bf16.mxu0 0
      %542 = vmatpush2.bf16.msra.mxu0 0
      %543 = vmatprep.subr.bf16.mxu0 0
      %544 = vmatpush2.bf16.msra.mxu0 0
      %545 = vmatprep.subr.bf16.mxu0 0
      %546 = vmatpush2.bf16.msra.mxu0 0
      %547 = vmatprep.subr.bf16.mxu0 0
      %548 = vmatpush2.bf16.msra.mxu0 0
      %549 = vmatprep.subr.bf16.mxu0 0
      %550 = vmatpush2.bf16.msra.mxu0 0
      %551 = vmatprep.subr.bf16.mxu0 0
      %552 = vmatpush2.bf16.msra.mxu0 0
      %553 = vmatprep.subr.bf16.mxu0 0
      %554 = vmatpush2.bf16.msra.mxu0 0
      %555 = vmatprep.mubr.bf16.mxu0 0
      %556 = vmatmul.mubr.bf16.gmra.mxu0 %v518
      %v557 = vpop.f32.mrf.mxu0
      %v558 = vadd.f32 0.0, %v557
      %v559 = vpop.f32.mrf.mxu0
      %v560 = vpop.f32.mrf.mxu0
      %v561 = vpop.f32.mrf.mxu0
      %562 = vdwg.mxu0
      %v564 = vsel %vm222, %v468, 0
      %v567 = vsel %vm473, %v220, 0
      %569 = vmatprep.subr.bf16.mxu0 0
      %570 = vmatpush1.bf16.msra.mxu0 0
      %571 = vmatprep.subr.bf16.mxu0 0
      %572 = vmatpush1.bf16.msra.mxu0 0
      %573 = vmatprep.subr.bf16.mxu0 0
      %574 = vmatpush1.bf16.msra.mxu0 0
      %575 = vmatprep.subr.bf16.mxu0 0
      %576 = vmatpush1.bf16.msra.mxu0 0
      %577 = vmatprep.subr.bf16.mxu0 0
      %578 = vmatpush1.bf16.msra.mxu0 0
      %579 = vmatprep.subr.bf16.mxu0 0
      %580 = vmatpush1.bf16.msra.mxu0 0
      %581 = vmatprep.subr.bf16.mxu0 0
      %582 = vmatpush1.bf16.msra.mxu0 0
      %583 = vmatprep.subr.bf16.mxu0 0
      %584 = vmatpush1.bf16.msra.mxu0 %v567
      %585 = vmatprep.subr.bf16.mxu0 0
      %586 = vmatpush2.bf16.msra.mxu0 0
      %587 = vmatprep.subr.bf16.mxu0 0
      %588 = vmatpush2.bf16.msra.mxu0 0
      %589 = vmatprep.subr.bf16.mxu0 0
      %590 = vmatpush2.bf16.msra.mxu0 0
      %591 = vmatprep.subr.bf16.mxu0 0
      %592 = vmatpush2.bf16.msra.mxu0 0
      %593 = vmatprep.subr.bf16.mxu0 0
      %594 = vmatpush2.bf16.msra.mxu0 0
      %595 = vmatprep.subr.bf16.mxu0 0
      %596 = vmatpush2.bf16.msra.mxu0 0
      %597 = vmatprep.subr.bf16.mxu0 0
      %598 = vmatpush2.bf16.msra.mxu0 0
      %599 = vmatprep.subr.bf16.mxu0 0
      %600 = vmatpush2.bf16.msra.mxu0 0
      %601 = vmatprep.mubr.bf16.mxu0 0
      %602 = vmatmul.mubr.bf16.gmra.mxu0 %v564
      %v603 = vpop.f32.mrf.mxu0
      %v604 = vadd.f32 0.0, %v603
      %v605 = vpop.f32.mrf.mxu0
      %v606 = vpop.f32.mrf.mxu0
      %v607 = vpop.f32.mrf.mxu0
      %608 = vdwg.mxu0
      %v610 = vsel %vm222, %v469, 0
      %v613 = vsel %vm473, %v221, 0
      %615 = vmatprep.subr.bf16.mxu0 0
      %616 = vmatpush1.bf16.msra.mxu0 0
      %617 = vmatprep.subr.bf16.mxu0 0
      %618 = vmatpush1.bf16.msra.mxu0 0
      %619 = vmatprep.subr.bf16.mxu0 0
      %620 = vmatpush1.bf16.msra.mxu0 0
      %621 = vmatprep.subr.bf16.mxu0 0
      %622 = vmatpush1.bf16.msra.mxu0 0
      %623 = vmatprep.subr.bf16.mxu0 0
      %624 = vmatpush1.bf16.msra.mxu0 0
      %625 = vmatprep.subr.bf16.mxu0 0
      %626 = vmatpush1.bf16.msra.mxu0 0
      %627 = vmatprep.subr.bf16.mxu0 0
      %628 = vmatpush1.bf16.msra.mxu0 0
      %629 = vmatprep.subr.bf16.mxu0 0
      %630 = vmatpush1.bf16.msra.mxu0 %v613
      %631 = vmatprep.subr.bf16.mxu0 0
      %632 = vmatpush2.bf16.msra.mxu0 0
      %633 = vmatprep.subr.bf16.mxu0 0
      %634 = vmatpush2.bf16.msra.mxu0 0
      %635 = vmatprep.subr.bf16.mxu0 0
      %636 = vmatpush2.bf16.msra.mxu0 0
      %637 = vmatprep.subr.bf16.mxu0 0
      %638 = vmatpush2.bf16.msra.mxu0 0
      %639 = vmatprep.subr.bf16.mxu0 0
      %640 = vmatpush2.bf16.msra.mxu0 0
      %641 = vmatprep.subr.bf16.mxu0 0
      %642 = vmatpush2.bf16.msra.mxu0 0
      %643 = vmatprep.subr.bf16.mxu0 0
      %644 = vmatpush2.bf16.msra.mxu0 0
      %645 = vmatprep.subr.bf16.mxu0 0
      %646 = vmatpush2.bf16.msra.mxu0 0
      %647 = vmatprep.mubr.bf16.mxu0 0
      %648 = vmatmul.mubr.bf16.gmra.mxu0 %v610
      %v649 = vpop.f32.mrf.mxu0
      %v650 = vadd.f32 0.0, %v649
      %v651 = vpop.f32.mrf.mxu0
      %v652 = vpop.f32.mrf.mxu0
      %v653 = vpop.f32.mrf.mxu0
      %654 = vdwg.mxu0
      %656 = vrot.lane.b32.xlu0 %v558, 8
      %v657 = vpop.permute.xlu0 %656
      %660 = vrot.lane.b32.xlu0 %v604, 16
      %v661 = vpop.permute.xlu0 %660
      %664 = vrot.lane.b32.xlu0 %v650, 24
      %v665 = vpop.permute.xlu0 %664
      %v667 = vsel %vm222, %v512, %v657
      %vm668 = vcmask 130048
      %v669 = vsel %vm668, %v667, %v661
      %vm670 = vcmask 195584
      %v671 = vsel %vm670, %v669, %v665
      %v672 = vpack.c.bf16 %v671, %v671
      %vm673 = vcmask 257024
      %674 = vst.msk [vmem:[%s208] sm:$0xf] %vm673, %v672
      %p675 = scmp.lt.s32.totalorder %s14, 1
      %s676 = scalar_select %p675, %s14, 1
      %s677 = smul.addr %s676, 4
      %s678 = scalar_lea.vmem %s3, %s677
      // Predicated region
      $region33: #{_lambda_.12} parent=31 // pred_check
        %p679 = pneg %p110
      $region34: #{_lambda_.12} parent=31 // pred_check_branch
        %681 = sbr.rel (%p679) target = $region36
      $region35: #{_lambda_.12} parent=31 // pred_region
        _
      $region36: #{_lambda_.12} parent=31 // pred_fallthru
        _
    $region32: #{_lambda_.12} parent=5 // pred_fallthru
      _
    %p682 = scmp.le.s32.totalorder 2, %s9
    // Predicated region
    $region37: #{_lambda_.12} parent=5 // pred_check
      %p683 = pneg %p682
    $region38: #{_lambda_.12} parent=5 // pred_check_branch
      %685 = sbr.rel (%p683) target = $region40
    $region39: #{_lambda_.12} parent=5 // pred_region
      %s686 = ssub.s32 %s9, 2
      // Predicated region
      $region41: #{_lambda_.12} parent=39 // pred_check
        %p687 = pneg %p116
      $region42: #{_lambda_.12} parent=39 // pred_check_branch
        %689 = sbr.rel (%p687) target = $region44
      $region43: #{_lambda_.12} parent=39 // pred_region
        %p690 = scmp.lt.s32.totalorder %s15, 1
        %s691 = scalar_select %p690, %s15, 1
        %s692 = smul.addr %s691, 4
        %s693 = scalar_lea.vmem %s3, %s692
      $region44: #{_lambda_.12} parent=39 // pred_fallthru
        _
    $region40: #{_lambda_.12} parent=5 // pred_fallthru
      _
  $region6: #{_lambda_.12} parent=0 // loop_footer
    %s13 = sadd.s32 1, %s9
  $region7: #{_lambda_.12} parent=0 // loop_footer_branch
    %8 = sbr.rel target = $region3
  $region8: #{_lambda_.12} parent=0 // loop_exit
    _

// kernel: _lambda_.15
$region0: #{_lambda_.15}
  #allocation0 [shape = 'u32[]', space=smem, size = 0x4, offset = 0x4, fixed_abs, tag = 'smem constant byte address 0x4 - core index']
  #allocation1 [shape = 'u32[144,128]{1,0:T(1,128)}', space=vmem, size = 0x12000, scoped, tag = 'internal scratch']
  %s0 = inlined_call_operand.vmem [shape: bf16[16,128], index: 0, kind: input, shape index: {}]
  %s1 = inlined_call_operand.vmem [shape: bf16[128,32], index: 1, kind: input, shape index: {}]
  %s2 = inlined_call_operand.vmem [shape: f32[1,32], index: 2, kind: input, shape index: {}]
  %s3 = inlined_call_operand.vmem [shape: f32[16,32], index: 3, kind: input, shape index: {}]
  %s4 = inlined_call_operand.vmem [shape: f32[16,32], index: 4, kind: output, shape index: {}]
  %s5 = sld [smem:[#allocation0]]
  $region26: #{_lambda_.15} parent=0
    _
  %s7 = ssub.s32 1, %s5
  %s8 = scalar_select 0, %s7, %s5
  // Predicated region
  $region2: #{_lambda_.15} parent=0 // pred_check
    _
  $region3: #{_lambda_.15} parent=0 // pred_check_branch
    %10 = sbr.rel (0) target = $region5
  $region4: #{_lambda_.15} parent=0 // pred_region
    _
  $region5: #{_lambda_.15} parent=0 // pred_fallthru
    _
  // Predicated region
  $region6: #{_lambda_.15} parent=0 // pred_check
    _
  $region7: #{_lambda_.15} parent=0 // pred_check_branch
    %12 = sbr.rel (0) target = $region9
  $region8: #{_lambda_.15} parent=0 // pred_region
    _
  $region9: #{_lambda_.15} parent=0 // pred_fallthru
    _
  // Predicated region
  $region10: #{_lambda_.15} parent=0 // pred_check
    _
  $region11: #{_lambda_.15} parent=0 // pred_check_branch
    %14 = sbr.rel (0) target = $region13
  $region12: #{_lambda_.15} parent=0 // pred_region
    _
  $region13: #{_lambda_.15} parent=0 // pred_fallthru
    _
  // Predicated region
  $region14: #{_lambda_.15} parent=0 // pred_check
    _
  $region15: #{_lambda_.15} parent=0 // pred_check_branch
    %16 = sbr.rel (0) target = $region17
  $region16: #{_lambda_.15} parent=0 // pred_region
    _
  $region17: #{_lambda_.15} parent=0 // pred_fallthru
    _
  %v18 = vld [vmem:[%s0] sm:$0xf]
  %v19 = vld [vmem:[%s0 + $0x4] sm:$0xf]
  %v20 = vld [vmem:[%s1] sm:$0xf]
  %v21 = vld [vmem:[%s1 + $0x4] sm:$0xf]
  %v22 = vld [vmem:[%s1 + $0x8] sm:$0xf]
  %v23 = vld [vmem:[%s1 + $0xc] sm:$0xf]
  %v24 = vld [vmem:[%s1 + $0x10] sm:$0xf]
  %v25 = vld [vmem:[%s1 + $0x14] sm:$0xf]
  %v26 = vld [vmem:[%s1 + $0x18] sm:$0xf]
  %v27 = vld [vmem:[%s1 + $0x1c] sm:$0xf]
  %v28 = vld [vmem:[%s1 + $0x20] sm:$0xf]
  %v29 = vld [vmem:[%s1 + $0x24] sm:$0xf]
  %v30 = vld [vmem:[%s1 + $0x28] sm:$0xf]
  %v31 = vld [vmem:[%s1 + $0x2c] sm:$0xf]
  %v32 = vld [vmem:[%s1 + $0x30] sm:$0xf]
  %v33 = vld [vmem:[%s1 + $0x34] sm:$0xf]
  %v34 = vld [vmem:[%s1 + $0x38] sm:$0xf]
  %v35 = vld [vmem:[%s1 + $0x3c] sm:$0xf]
  %v36 = vld [vmem:[%s2] sm:$0x1]
  %v38 = vlaneseq
  %v39 = vshrl.u32 %v38, 7
  %v40 = vsub.s32 0, %v39
  %v41 = vrot.slane %v36, %v40
  %v45 = vunpack.c.l.b16 %v18
  %v46 = vunpack.c.l.b16 %v19
  %v47 = vpack.c.b16 %v46, %v45
  %v65 = vunpack.c.l.b16 %v20
  %v66 = vunpack.c.l.b16 %v21
  %v67 = vunpack.c.l.b16 %v22
  %v68 = vunpack.c.l.b16 %v23
  %v69 = vunpack.c.l.b16 %v24
  %v70 = vunpack.c.l.b16 %v25
  %v71 = vunpack.c.l.b16 %v26
  %v72 = vunpack.c.l.b16 %v27
  %v73 = vunpack.c.l.b16 %v28
  %v74 = vunpack.c.l.b16 %v29
  %v75 = vunpack.c.l.b16 %v30
  %v76 = vunpack.c.l.b16 %v31
  %v77 = vunpack.c.l.b16 %v32
  %v78 = vunpack.c.l.b16 %v33
  %v79 = vunpack.c.l.b16 %v34
  %v80 = vunpack.c.l.b16 %v35
  %v81 = vpack.c.b16 %v66, %v65
  %v82 = vpack.c.b16 %v68, %v67
  %v83 = vpack.c.b16 %v70, %v69
  %v84 = vpack.c.b16 %v72, %v71
  %v85 = vpack.c.b16 %v74, %v73
  %v86 = vpack.c.b16 %v76, %v75
  %v87 = vpack.c.b16 %v78, %v77
  %v88 = vpack.c.b16 %v80, %v79
  %97 = vmatprep.subr.bf16.mxu0 0
  %98 = vmatpush1.bf16.msra.mxu0 %v88
  %99 = vmatprep.subr.bf16.mxu0 0
  %100 = vmatpush1.bf16.msra.mxu0 %v87
  %101 = vmatprep.subr.bf16.mxu0 0
  %102 = vmatpush1.bf16.msra.mxu0 %v86
  %103 = vmatprep.subr.bf16.mxu0 0
  %104 = vmatpush1.bf16.msra.mxu0 %v85
  %105 = vmatprep.subr.bf16.mxu0 0
  %106 = vmatpush1.bf16.msra.mxu0 %v84
  %107 = vmatprep.subr.bf16.mxu0 0
  %108 = vmatpush1.bf16.msra.mxu0 %v83
  %109 = vmatprep.subr.bf16.mxu0 0
  %110 = vmatpush1.bf16.msra.mxu0 %v82
  %111 = vmatprep.subr.bf16.mxu0 0
  %112 = vmatpush1.bf16.msra.mxu0 %v81
  %113 = vmatprep.subr.bf16.mxu0 0
  %114 = vmatpush2.bf16.msra.mxu0 0
  %115 = vmatprep.subr.bf16.mxu0 0
  %116 = vmatpush2.bf16.msra.mxu0 0
  %117 = vmatprep.subr.bf16.mxu0 0
  %118 = vmatpush2.bf16.msra.mxu0 0
  %119 = vmatprep.subr.bf16.mxu0 0
  %120 = vmatpush2.bf16.msra.mxu0 0
  %121 = vmatprep.subr.bf16.mxu0 0
  %122 = vmatpush2.bf16.msra.mxu0 0
  %123 = vmatprep.subr.bf16.mxu0 0
  %124 = vmatpush2.bf16.msra.mxu0 0
  %125 = vmatprep.subr.bf16.mxu0 0
  %126 = vmatpush2.bf16.msra.mxu0 0
  %127 = vmatprep.subr.bf16.mxu0 0
  %128 = vmatpush2.bf16.msra.mxu0 0
  %129 = vmatprep.mubr.bf16.mxu0 0
  %130 = vmatmul.mubr.bf16.gmra.mxu0 %v47
  %v131 = vpop.f32.mrf.mxu0
  %v132 = vadd.f32 %v41, %v131
  %v133 = vpop.f32.mrf.mxu0
  %v134 = vpop.f32.mrf.mxu0
  %v135 = vadd.f32 %v41, %v134
  %v136 = vpop.f32.mrf.mxu0
  %137 = vdwg.mxu0
  %v138 = vld [vmem:[%s3] sm:$0xff]
  %v139 = vld [vmem:[%s3 + $0x8] sm:$0xff]
  %v140 = vadd.f32 %v132, %v138
  %v141 = vadd.f32 %v135, %v139
  %vm142 = vcmask 261120
  %143 = vst.msk [vmem:[%s4] sm:$0xff] %vm142, %v140
  %144 = vst.msk [vmem:[%s4 + $0x8] sm:$0xff] %vm142, %v141
  // Predicated region
  $region18: #{_lambda_.15} parent=0 // pred_check
    _
  $region19: #{_lambda_.15} parent=0 // pred_check_branch
    %146 = sbr.rel (0) target = $region21
  $region20: #{_lambda_.15} parent=0 // pred_region
    _
  $region21: #{_lambda_.15} parent=0 // pred_fallthru
    _
  // Predicated region
  $region22: #{_lambda_.15} parent=0 // pred_check
    _
  $region23: #{_lambda_.15} parent=0 // pred_check_branch
    %148 = sbr.rel (0) target = $region25
  $region24: #{_lambda_.15} parent=0 // pred_region
    _
  $region25: #{_lambda_.15} parent=0 // pred_fallthru
    _

// kernel: _lambda_.21
$region0: #{_lambda_.21}
  #allocation0 [shape = 'u32[]', space=smem, size = 0x4, offset = 0x4, fixed_abs, tag = 'smem constant byte address 0x4 - core index']
  #allocation1 [shape = 'u32[144,128]{1,0:T(1,128)}', space=vmem, size = 0x12000, scoped, tag = 'internal scratch']
  %s0 = inlined_call_operand.vmem [shape: f32[16,32], index: 0, kind: input, shape index: {}]
  %s1 = inlined_call_operand.vmem [shape: bf16[64,32], index: 1, kind: input, shape index: {}]
  %s2 = inlined_call_operand.hbm [shape: f32[16,64], index: 2, kind: output, shape index: {}]
  %s3 = sld [smem:[#allocation0]]
  $region18: #{_lambda_.21} parent=0
    _
  %s5 = ssub.s32 1, %s3
  %s6 = scalar_select 0, %s5, %s3
  $region1: #{_lambda_.21} parent=0
    #allocation2 [shape = 'u8[8192]{0}', space=vmem, size = 0x2000, scoped, tag = 'output window, operand 0, single buffered']
    #allocation3 [shape = 's32[1]{0}', space=sflag, size = 0x4, scoped, tag = 'scoped memory for _lambda_.21']
    %7 = vsyncpa [#allocation3], 0
    // Predicated region
    $region2: #{_lambda_.21} parent=1 // pred_check
      _
    $region3: #{_lambda_.21} parent=1 // pred_check_branch
      %9 = sbr.rel (0) target = $region5
    $region4: #{_lambda_.21} parent=1 // pred_region
      _
    $region5: #{_lambda_.21} parent=1 // pred_fallthru
      _
    // Predicated region
    $region6: #{_lambda_.21} parent=1 // pred_check
      _
    $region7: #{_lambda_.21} parent=1 // pred_check_branch
      %11 = sbr.rel (0) target = $region9
    $region8: #{_lambda_.21} parent=1 // pred_region
      _
    $region9: #{_lambda_.21} parent=1 // pred_fallthru
      _
    %v13 = vld [vmem:[%s0] sm:$0xff]
    %v14 = vld [vmem:[%s0 + $0x8] sm:$0xff]
    %v15 = vpack.c.bf16 %v14, %v13
    %v16 = vld [vmem:[%s1] sm:$0xf]
    %v17 = vld [vmem:[%s1 + $0x4] sm:$0xf]
    %v18 = vld [vmem:[%s1 + $0x8] sm:$0xf]
    %v19 = vld [vmem:[%s1 + $0xc] sm:$0xf]
    %v20 = vld [vmem:[%s1 + $0x10] sm:$0xf]
    %v21 = vld [vmem:[%s1 + $0x14] sm:$0xf]
    %v22 = vld [vmem:[%s1 + $0x18] sm:$0xf]
    %v23 = vld [vmem:[%s1 + $0x1c] sm:$0xf]
    %v32 = vunpack.c.l.b16 %v16
    %v33 = vunpack.c.l.b16 %v17
    %v34 = vunpack.c.l.b16 %v18
    %v35 = vunpack.c.l.b16 %v19
    %v36 = vunpack.c.l.b16 %v20
    %v37 = vunpack.c.l.b16 %v21
    %v38 = vunpack.c.l.b16 %v22
    %v39 = vunpack.c.l.b16 %v23
    %v40 = vpack.c.b16 %v33, %v32
    %v41 = vpack.c.b16 %v35, %v34
    %v42 = vpack.c.b16 %v37, %v36
    %v43 = vpack.c.b16 %v39, %v38
    %vm44 = vcmask 261120
    %v46 = vsel %vm44, %v15, 0
    %v49 = vsel %vm44, %v40, 0
    %v52 = vsel %vm44, %v41, 0
    %v55 = vsel %vm44, %v42, 0
    %v58 = vsel %vm44, %v43, 0
    %60 = vmatprep.subr.bf16.mxu0 0
    %61 = vmatpush1.bf16.xpose.msra.mxu0 0
    %62 = vmatprep.subr.bf16.mxu0 0
    %63 = vmatpush1.bf16.xpose.msra.mxu0 0
    %64 = vmatprep.subr.bf16.mxu0 0
    %65 = vmatpush1.bf16.xpose.msra.mxu0 0
    %66 = vmatprep.subr.bf16.mxu0 0
    %67 = vmatpush1.bf16.xpose.msra.mxu0 0
    %68 = vmatprep.subr.bf16.mxu0 0
    %69 = vmatpush1.bf16.xpose.msra.mxu0 %v58
    %70 = vmatprep.subr.bf16.mxu0 0
    %71 = vmatpush1.bf16.xpose.msra.mxu0 %v55
    %72 = vmatprep.subr.bf16.mxu0 0
    %73 = vmatpush1.bf16.xpose.msra.mxu0 %v52
    %74 = vmatprep.subr.bf16.mxu0 0
    %75 = vmatpush1.bf16.xpose.msra.mxu0 %v49
    %76 = vmatprep.subr.bf16.mxu0 0
    %77 = vmatpush2.bf16.xpose.msra.mxu0 0
    %78 = vmatprep.subr.bf16.mxu0 0
    %79 = vmatpush2.bf16.xpose.msra.mxu0 0
    %80 = vmatprep.subr.bf16.mxu0 0
    %81 = vmatpush2.bf16.xpose.msra.mxu0 0
    %82 = vmatprep.subr.bf16.mxu0 0
    %83 = vmatpush2.bf16.xpose.msra.mxu0 0
    %84 = vmatprep.subr.bf16.mxu0 0
    %85 = vmatpush2.bf16.xpose.msra.mxu0 0
    %86 = vmatprep.subr.bf16.mxu0 0
    %87 = vmatpush2.bf16.xpose.msra.mxu0 0
    %88 = vmatprep.subr.bf16.mxu0 0
    %89 = vmatpush2.bf16.xpose.msra.mxu0 0
    %90 = vmatprep.subr.bf16.mxu0 0
    %91 = vmatpush2.bf16.xpose.msra.mxu0 0
    %92 = vmatprep.mubr.bf16.mxu0 0
    %93 = vmatmul.mubr.bf16.gmra.mxu0 %v46
    %v94 = vpop.f32.mrf.mxu0
    %v95 = vadd.f32 0.0, %v94
    %v96 = vpop.f32.mrf.mxu0
    %v97 = vpop.f32.mrf.mxu0
    %v98 = vadd.f32 0.0, %v97
    %v99 = vpop.f32.mrf.mxu0
    %100 = vdwg.mxu0
    %vm101 = vcmask 523264
    %102 = vst.msk [vmem:[#allocation2] sm:$0xff] %vm101, %v95
    %103 = vst.msk [vmem:[#allocation2 + $0x8] sm:$0xff] %vm101, %v98
    // Predicated region
    $region10: #{_lambda_.21} parent=1 // pred_check
      _
    $region11: #{_lambda_.21} parent=1 // pred_check_branch
      %105 = sbr.rel (0) target = $region13
    $region12: #{_lambda_.21} parent=1 // pred_region
      %s107 = ssub.s32 256, 256
      %108 = vsyncadd [#allocation3], %s107
      %s109 = sshll.u32 [#allocation2], 4
      %s110 = int_to_ptr.vmem [resolvable:$true] %s109
      %115 = dma.vmem_to_hbm [thread:$0]  %s110, 256, %s2, [#allocation3], 128, 128, 8
    $region13: #{_lambda_.21} parent=1 // pred_fallthru
      _
    // Predicated region
    $region14: #{_lambda_.21} parent=1 // pred_check
      _
    $region15: #{_lambda_.21} parent=1 // pred_check_branch
      %117 = sbr.rel (0) target = $region17
    $region16: #{_lambda_.21} parent=1 // pred_region
      %118 = dma.done [#allocation3], 256
    $region17: #{_lambda_.21} parent=1 // pred_fallthru
      _
    %119 = vsyncpa [#allocation3], 1

</llo_original>
